<compile_context>
chip_gen: v5e
topology: v5e:2x2
jax: 0.10.0
libtpu: 0.0.40
codegen_flags: <defaults>
</compile_context>

<pallas_src>
import functools

import jax
import jax.numpy as jnp
from jax.experimental import pallas as pl
from jax.experimental.pallas import tpu as pltpu


def _bc_head_kernel(x_ref, w3_ref, sh_ref, w1_ref, b1_ref, o_ref, xpad_ref,
                    *, H, W, Cin, Cmid):
    # x_ref   : (H, W, Cin)     unpadded input, one batch element
    # w3_ref  : (9, Cin, Cmid)  fused 3x3 weights (BN scale folded in), tap-major
    # sh_ref  : (1, Cmid)       fused folded BN shift
    # w1_ref  : (NCo, Cmid)     block-diagonal fused 1x1 weights, transposed
    # b1_ref  : (NCo, 1)        fused 1x1 bias (column vector, lane-broadcast)
    # o_ref   : (NCo, H*W)      lane-dense output
    # xpad_ref: VMEM scratch (H+2, W+2, Cin)
    Hp, Wp = H + 2, W + 2

    # In-kernel SAME padding (no HBM pad round trip).  Re-zero every grid step so
    # correctness does not depend on which core ran which step (megacore-safe).
    xpad_ref[...] = jnp.zeros((Hp, Wp, Cin), jnp.float32)
    xpad_ref[1:H + 1, 1:W + 1, :] = x_ref[...]

    # 3x3 conv = 9 MXU matmuls; only 3 W-shifted slabs are materialized (one per
    # kernel column dw), the dh shift is a free leading-axis slice of the slab.
    acc = None
    for dw in range(3):                                   # static unroll
        slab = xpad_ref[:, dw:dw + W, :]                  # (Hp, W, Cin)
        for dh in range(3):                               # static unroll
            patch = slab[dh:dh + H].reshape(H * W, Cin)   # W % 8 == 0 -> cheap
            t = jnp.dot(patch, w3_ref[3 * dh + dw],
                        preferred_element_type=jnp.float32)
            acc = t if acc is None else acc + t           # (H*W, Cmid)

    # BN scale already folded into w3: only shift + ReLU on the 128-wide hidden.
    hid = jnp.maximum(acc + sh_ref[...], 0.0)                        # (H*W, Cmid)

    # Block-diagonal 1x1 conv, produced directly in lane-dense (NCo, H*W) form:
    # out_t[c, p] = sum_m w1t[c, m] * hid[p, m]
    out_t = jax.lax.dot_general(w1_ref[...], hid,
                                dimension_numbers=(((1,), (1,)), ((), ())),
                                preferred_element_type=jnp.float32)  # (NCo, H*W)
    o_ref[...] = jnp.maximum(out_t + b1_ref[...], 0.0)               # bias + ReLU


def fuse_bc_head_params(params):
    """Fuse object+parts parameters once: Cmid -> 2*channel, BN scale folded into
    the 3x3 weights, block-diagonal transposed 1x1 weights."""
    w3_o, sc_o, sh_o, w1_o, b1_o = params["object"]
    w3_p, sc_p, sh_p, w1_p, b1_p = params["parts"]
    Cin, Ch = w3_o.shape[2], w3_o.shape[3]
    NC = w1_o.shape[-1]
    NCo = 2 * NC

    # Fold BN scale into the (bias-free) 3x3 weights; only the shift stays.
    w3 = jnp.concatenate([w3_o.reshape(9, Cin, Ch) * sc_o,
                          w3_p.reshape(9, Cin, Ch) * sc_p], axis=-1)  # (9, Cin, 2Ch)
    sh = jnp.concatenate([sh_o, sh_p]).reshape(1, 2 * Ch)

    w1t = jnp.zeros((NCo, 2 * Ch), jnp.float32)                       # block diagonal
    w1t = w1t.at[:NC, :Ch].set(w1_o.T)
    w1t = w1t.at[NC:, Ch:].set(w1_p.T)
    b1t = jnp.concatenate([b1_o, b1_p]).reshape(NCo, 1)
    return w3, sh, w1t, b1t


@jax.jit
def bc_head_forward(x_nchw, fused):
    """Full BC_head forward. Input NCHW, outputs (object_map, parts_map) in NCHW."""
    w3, sh, w1t, b1t = fused
    x = jnp.transpose(x_nchw, (0, 2, 3, 1))              # -> NHWC (lane dim = C)
    N, H, W, Cin = x.shape
    Cmid = w3.shape[-1]
    NCo = w1t.shape[0]
    NC = NCo // 2

    kernel = functools.partial(_bc_head_kernel, H=H, W=W, Cin=Cin, Cmid=Cmid)

    out = pl.pallas_call(
        kernel,
        out_shape=jax.ShapeDtypeStruct((N, NCo, H * W), jnp.float32),
        grid=(N,),
        in_specs=[
            pl.BlockSpec((None, H, W, Cin), lambda n: (n, 0, 0, 0)),
            pl.BlockSpec((9, Cin, Cmid), lambda n: (0, 0, 0)),
            pl.BlockSpec((1, Cmid), lambda n: (0, 0)),
            pl.BlockSpec((NCo, Cmid), lambda n: (0, 0)),
            pl.BlockSpec((NCo, 1), lambda n: (0, 0)),
        ],
        out_specs=pl.BlockSpec((None, NCo, H * W), lambda n: (n, 0, 0)),
        scratch_shapes=[pltpu.VMEM((H + 2, W + 2, Cin), jnp.float32)],
        compiler_params=pltpu.CompilerParams(dimension_semantics=("parallel",)),
    )(x, w3, sh, w1t, b1t)

    out = out.reshape(N, NCo, H, W)                      # already NCHW — no transpose
    return out[:, :NC], out[:, NC:]


def _ref_branch(x_nhwc, w3, bn_scale, bn_shift, w1, b1):
    """Pure-JAX reference (lax conv) for correctness checking."""
    y = jax.lax.conv_general_dilated(
        x_nhwc, w3, window_strides=(1, 1), padding="SAME",
        dimension_numbers=("NHWC", "HWIO", "NHWC"))
    y = jnp.maximum(y * bn_scale + bn_shift, 0.0)
    y = jnp.einsum("nhwc,cd->nhwd", y, w1) + b1
    return jnp.maximum(y, 0.0)


def make_params(key, num_classes, cin=64, channel=64):
    """Deterministic synthetic parameters for one BC_head (both branches)."""
    eps = 1e-5

    def branch(k):
        k1, k2, k3, k4, k5 = jax.random.split(k, 5)
        w3 = jax.random.normal(k1, (3, 3, cin, channel), jnp.float32) * 0.05
        gamma = 1.0 + 0.1 * jax.random.normal(k2, (channel,), jnp.float32)
        beta = 0.1 * jax.random.normal(k3, (channel,), jnp.float32)
        # BN inference mode with running_mean=0, running_var=1:
        scale = gamma / jnp.sqrt(1.0 + eps)
        shift = beta
        w1 = jax.random.normal(k4, (channel, num_classes), jnp.float32) * 0.05
        b1 = 0.1 * jax.random.normal(k5, (num_classes,), jnp.float32)
        return (w3, scale, shift, w1, b1)

    ko, kp = jax.random.split(key)
    return {"object": branch(ko), "parts": branch(kp)}


if __name__ == "__main__":
    key = jax.random.PRNGKey(0)
    kx, kp = jax.random.split(key)

    N, Cin, H, W = 2, 64, 16, 16     # Conv2d(64, ...) fixes Cin=64
    num_classes = 8

    x_nchw = jax.random.normal(kx, (N, Cin, H, W), jnp.float32)
    params = make_params(kp, num_classes)
    fused = fuse_bc_head_params(params)      # one-time host-side parameter fusion

    obj_map, parts_map = jax.block_until_ready(bc_head_forward(x_nchw, fused))

    # Verify against a pure-JAX reference (uses the raw, un-fused parameters).
    x_nhwc = jnp.transpose(x_nchw, (0, 2, 3, 1))
    ref_obj = jnp.transpose(_ref_branch(x_nhwc, *params["object"]), (0, 3, 1, 2))
    ref_prt = jnp.transpose(_ref_branch(x_nhwc, *params["parts"]), (0, 3, 1, 2))

    assert obj_map.shape == (N, num_classes, H, W)
    assert parts_map.shape == (N, num_classes, H, W)
    assert jnp.allclose(obj_map, ref_obj, atol=1e-4, rtol=1e-4)
    assert jnp.allclose(parts_map, ref_prt, atol=1e-4, rtol=1e-4)

    print("KERNEL_OK")
</pallas_src>

<mosaic_0001>
module attributes {stable_mosaic.version = 11 : i64} {
  func.func @_bc_head_kernel(%arg0: i32, %arg1: memref<1x16x16x64xf32, #tpu.memory_space<vmem>>, %arg2: memref<9x64x128xf32, #tpu.memory_space<vmem>>, %arg3: memref<1x128xf32, #tpu.memory_space<vmem>>, %arg4: memref<16x128xf32, #tpu.memory_space<vmem>>, %arg5: memref<16x1xf32, #tpu.memory_space<vmem>>, %arg6: memref<1x16x256xf32, #tpu.memory_space<vmem>>, %arg7: memref<18x18x64xf32, #tpu.memory_space<vmem>>) attributes {dimension_semantics = [#tpu.dimension_semantics<parallel>], iteration_bounds = array<i64: 2>, scalar_prefetch = 0 : i64, scratch_operands = 1 : i64, tpu.core_type = #tpu.core_type<tc>, window_params = [{transform_indices = @transform_0, window_bounds = array<i64: 1, 16, 16, 64>}, {pipeline_mode = #tpu.pipeline_mode<synchronous>, transform_indices = @transform_1, window_bounds = array<i64: 9, 64, 128>}, {pipeline_mode = #tpu.pipeline_mode<synchronous>, transform_indices = @transform_2, window_bounds = array<i64: 1, 128>}, {pipeline_mode = #tpu.pipeline_mode<synchronous>, transform_indices = @transform_3, window_bounds = array<i64: 16, 128>}, {pipeline_mode = #tpu.pipeline_mode<synchronous>, transform_indices = @transform_4, window_bounds = array<i64: 16, 1>}, {transform_indices = @transform_5, window_bounds = array<i64: 1, 16, 256>}]} {
    %cst = arith.constant 0.000000e+00 : f32
    %0 = vector.broadcast %cst : f32 to vector<18x18x64xf32>
    %c0 = arith.constant 0 : index
    %c0_0 = arith.constant 0 : index
    %c0_1 = arith.constant 0 : index
    %1 = vector.load %arg7[%c0, %c0_0, %c0_1] : memref<18x18x64xf32, #tpu.memory_space<vmem>>, vector<18x18x64xf32>
    tpu.vector_store %arg7[%c0, %c0_0, %c0_1], %0 {strides = array<i32>} : memref<18x18x64xf32, #tpu.memory_space<vmem>>, vector<18x18x64xf32>,
    %c0_2 = arith.constant 0 : index
    %c0_3 = arith.constant 0 : index
    %c0_4 = arith.constant 0 : index
    %c0_5 = arith.constant 0 : index
    %2 = vector.load %arg1[%c0_2, %c0_3, %c0_4, %c0_5] : memref<1x16x16x64xf32, #tpu.memory_space<vmem>>, vector<1x16x16x64xf32>
    %3 = vector.shape_cast %2 : vector<1x16x16x64xf32> to vector<16x16x64xf32>
    %c1 = arith.constant 1 : index
    %c1_6 = arith.constant 1 : index
    %c0_7 = arith.constant 0 : index
    %4 = vector.load %arg7[%c1, %c1_6, %c0_7] : memref<18x18x64xf32, #tpu.memory_space<vmem>>, vector<16x16x64xf32>
    tpu.vector_store %arg7[%c1, %c1_6, %c0_7], %3 {strides = array<i32>} : memref<18x18x64xf32, #tpu.memory_space<vmem>>, vector<16x16x64xf32>,
    %c0_8 = arith.constant 0 : index
    %c0_9 = arith.constant 0 : index
    %c0_10 = arith.constant 0 : index
    %5 = vector.load %arg7[%c0_8, %c0_9, %c0_10] : memref<18x18x64xf32, #tpu.memory_space<vmem>>, vector<18x16x64xf32>
    %6 = vector.extract_strided_slice %5 {offsets = [0, 0, 0], sizes = [16, 16, 64], strides = [1, 1, 1]} : vector<18x16x64xf32> to vector<16x16x64xf32>
    %7 = vector.shape_cast %6 : vector<16x16x64xf32> to vector<256x64xf32>
    %c0_11 = arith.constant 0 : index
    %c0_12 = arith.constant 0 : index
    %c0_13 = arith.constant 0 : index
    %8 = vector.load %arg2[%c0_11, %c0_12, %c0_13] : memref<9x64x128xf32, #tpu.memory_space<vmem>>, vector<1x64x128xf32>
    %9 = vector.shape_cast %8 : vector<1x64x128xf32> to vector<64x128xf32>
    %cst_14 = arith.constant dense<0.000000e+00> : vector<256x128xf32>
    %10 = tpu.matmul %7, %9, %cst_14 {dimension_numbers = #tpu.dot_dimension_numbers<[1], [0], [0], [1], [0, 0, 1, 1], [], []>} : vector<256x64xf32>, vector<64x128xf32>, vector<256x128xf32> -> vector<256x128xf32>
    %11 = vector.extract_strided_slice %5 {offsets = [1, 0, 0], sizes = [16, 16, 64], strides = [1, 1, 1]} : vector<18x16x64xf32> to vector<16x16x64xf32>
    %12 = vector.shape_cast %11 : vector<16x16x64xf32> to vector<256x64xf32>
    %c3 = arith.constant 3 : index
    %c0_15 = arith.constant 0 : index
    %c0_16 = arith.constant 0 : index
    %13 = vector.load %arg2[%c3, %c0_15, %c0_16] : memref<9x64x128xf32, #tpu.memory_space<vmem>>, vector<1x64x128xf32>
    %14 = vector.shape_cast %13 : vector<1x64x128xf32> to vector<64x128xf32>
    %cst_17 = arith.constant dense<0.000000e+00> : vector<256x128xf32>
    %15 = tpu.matmul %12, %14, %cst_17 {dimension_numbers = #tpu.dot_dimension_numbers<[1], [0], [0], [1], [0, 0, 1, 1], [], []>} : vector<256x64xf32>, vector<64x128xf32>, vector<256x128xf32> -> vector<256x128xf32>
    %16 = arith.addf %10, %15 : vector<256x128xf32>
    %17 = vector.extract_strided_slice %5 {offsets = [2, 0, 0], sizes = [16, 16, 64], strides = [1, 1, 1]} : vector<18x16x64xf32> to vector<16x16x64xf32>
    %18 = vector.shape_cast %17 : vector<16x16x64xf32> to vector<256x64xf32>
    %c6 = arith.constant 6 : index
    %c0_18 = arith.constant 0 : index
    %c0_19 = arith.constant 0 : index
    %19 = vector.load %arg2[%c6, %c0_18, %c0_19] : memref<9x64x128xf32, #tpu.memory_space<vmem>>, vector<1x64x128xf32>
    %20 = vector.shape_cast %19 : vector<1x64x128xf32> to vector<64x128xf32>
    %cst_20 = arith.constant dense<0.000000e+00> : vector<256x128xf32>
    %21 = tpu.matmul %18, %20, %cst_20 {dimension_numbers = #tpu.dot_dimension_numbers<[1], [0], [0], [1], [0, 0, 1, 1], [], []>} : vector<256x64xf32>, vector<64x128xf32>, vector<256x128xf32> -> vector<256x128xf32>
    %22 = arith.addf %16, %21 : vector<256x128xf32>
    %c0_21 = arith.constant 0 : index
    %c1_22 = arith.constant 1 : index
    %c0_23 = arith.constant 0 : index
    %23 = vector.load %arg7[%c0_21, %c1_22, %c0_23] : memref<18x18x64xf32, #tpu.memory_space<vmem>>, vector<18x16x64xf32>
    %24 = vector.extract_strided_slice %23 {offsets = [0, 0, 0], sizes = [16, 16, 64], strides = [1, 1, 1]} : vector<18x16x64xf32> to vector<16x16x64xf32>
    %25 = vector.shape_cast %24 : vector<16x16x64xf32> to vector<256x64xf32>
    %c1_24 = arith.constant 1 : index
    %c0_25 = arith.constant 0 : index
    %c0_26 = arith.constant 0 : index
    %26 = vector.load %arg2[%c1_24, %c0_25, %c0_26] : memref<9x64x128xf32, #tpu.memory_space<vmem>>, vector<1x64x128xf32>
    %27 = vector.shape_cast %26 : vector<1x64x128xf32> to vector<64x128xf32>
    %cst_27 = arith.constant dense<0.000000e+00> : vector<256x128xf32>
    %28 = tpu.matmul %25, %27, %cst_27 {dimension_numbers = #tpu.dot_dimension_numbers<[1], [0], [0], [1], [0, 0, 1, 1], [], []>} : vector<256x64xf32>, vector<64x128xf32>, vector<256x128xf32> -> vector<256x128xf32>
    %29 = arith.addf %22, %28 : vector<256x128xf32>
    %30 = vector.extract_strided_slice %23 {offsets = [1, 0, 0], sizes = [16, 16, 64], strides = [1, 1, 1]} : vector<18x16x64xf32> to vector<16x16x64xf32>
    %31 = vector.shape_cast %30 : vector<16x16x64xf32> to vector<256x64xf32>
    %c4 = arith.constant 4 : index
    %c0_28 = arith.constant 0 : index
    %c0_29 = arith.constant 0 : index
    %32 = vector.load %arg2[%c4, %c0_28, %c0_29] : memref<9x64x128xf32, #tpu.memory_space<vmem>>, vector<1x64x128xf32>
    %33 = vector.shape_cast %32 : vector<1x64x128xf32> to vector<64x128xf32>
    %cst_30 = arith.constant dense<0.000000e+00> : vector<256x128xf32>
    %34 = tpu.matmul %31, %33, %cst_30 {dimension_numbers = #tpu.dot_dimension_numbers<[1], [0], [0], [1], [0, 0, 1, 1], [], []>} : vector<256x64xf32>, vector<64x128xf32>, vector<256x128xf32> -> vector<256x128xf32>
    %35 = arith.addf %29, %34 : vector<256x128xf32>
    %36 = vector.extract_strided_slice %23 {offsets = [2, 0, 0], sizes = [16, 16, 64], strides = [1, 1, 1]} : vector<18x16x64xf32> to vector<16x16x64xf32>
    %37 = vector.shape_cast %36 : vector<16x16x64xf32> to vector<256x64xf32>
    %c7 = arith.constant 7 : index
    %c0_31 = arith.constant 0 : index
    %c0_32 = arith.constant 0 : index
    %38 = vector.load %arg2[%c7, %c0_31, %c0_32] : memref<9x64x128xf32, #tpu.memory_space<vmem>>, vector<1x64x128xf32>
    %39 = vector.shape_cast %38 : vector<1x64x128xf32> to vector<64x128xf32>
    %cst_33 = arith.constant dense<0.000000e+00> : vector<256x128xf32>
    %40 = tpu.matmul %37, %39, %cst_33 {dimension_numbers = #tpu.dot_dimension_numbers<[1], [0], [0], [1], [0, 0, 1, 1], [], []>} : vector<256x64xf32>, vector<64x128xf32>, vector<256x128xf32> -> vector<256x128xf32>
    %41 = arith.addf %35, %40 : vector<256x128xf32>
    %c0_34 = arith.constant 0 : index
    %c2 = arith.constant 2 : index
    %c0_35 = arith.constant 0 : index
    %42 = vector.load %arg7[%c0_34, %c2, %c0_35] : memref<18x18x64xf32, #tpu.memory_space<vmem>>, vector<18x16x64xf32>
    %43 = vector.extract_strided_slice %42 {offsets = [0, 0, 0], sizes = [16, 16, 64], strides = [1, 1, 1]} : vector<18x16x64xf32> to vector<16x16x64xf32>
    %44 = vector.shape_cast %43 : vector<16x16x64xf32> to vector<256x64xf32>
    %c2_36 = arith.constant 2 : index
    %c0_37 = arith.constant 0 : index
    %c0_38 = arith.constant 0 : index
    %45 = vector.load %arg2[%c2_36, %c0_37, %c0_38] : memref<9x64x128xf32, #tpu.memory_space<vmem>>, vector<1x64x128xf32>
    %46 = vector.shape_cast %45 : vector<1x64x128xf32> to vector<64x128xf32>
    %cst_39 = arith.constant dense<0.000000e+00> : vector<256x128xf32>
    %47 = tpu.matmul %44, %46, %cst_39 {dimension_numbers = #tpu.dot_dimension_numbers<[1], [0], [0], [1], [0, 0, 1, 1], [], []>} : vector<256x64xf32>, vector<64x128xf32>, vector<256x128xf32> -> vector<256x128xf32>
    %48 = arith.addf %41, %47 : vector<256x128xf32>
    %49 = vector.extract_strided_slice %42 {offsets = [1, 0, 0], sizes = [16, 16, 64], strides = [1, 1, 1]} : vector<18x16x64xf32> to vector<16x16x64xf32>
    %50 = vector.shape_cast %49 : vector<16x16x64xf32> to vector<256x64xf32>
    %c5 = arith.constant 5 : index
    %c0_40 = arith.constant 0 : index
    %c0_41 = arith.constant 0 : index
    %51 = vector.load %arg2[%c5, %c0_40, %c0_41] : memref<9x64x128xf32, #tpu.memory_space<vmem>>, vector<1x64x128xf32>
    %52 = vector.shape_cast %51 : vector<1x64x128xf32> to vector<64x128xf32>
    %cst_42 = arith.constant dense<0.000000e+00> : vector<256x128xf32>
    %53 = tpu.matmul %50, %52, %cst_42 {dimension_numbers = #tpu.dot_dimension_numbers<[1], [0], [0], [1], [0, 0, 1, 1], [], []>} : vector<256x64xf32>, vector<64x128xf32>, vector<256x128xf32> -> vector<256x128xf32>
    %54 = arith.addf %48, %53 : vector<256x128xf32>
    %55 = vector.extract_strided_slice %42 {offsets = [2, 0, 0], sizes = [16, 16, 64], strides = [1, 1, 1]} : vector<18x16x64xf32> to vector<16x16x64xf32>
    %56 = vector.shape_cast %55 : vector<16x16x64xf32> to vector<256x64xf32>
    %c8 = arith.constant 8 : index
    %c0_43 = arith.constant 0 : index
    %c0_44 = arith.constant 0 : index
    %57 = vector.load %arg2[%c8, %c0_43, %c0_44] : memref<9x64x128xf32, #tpu.memory_space<vmem>>, vector<1x64x128xf32>
    %58 = vector.shape_cast %57 : vector<1x64x128xf32> to vector<64x128xf32>
    %cst_45 = arith.constant dense<0.000000e+00> : vector<256x128xf32>
    %59 = tpu.matmul %56, %58, %cst_45 {dimension_numbers = #tpu.dot_dimension_numbers<[1], [0], [0], [1], [0, 0, 1, 1], [], []>} : vector<256x64xf32>, vector<64x128xf32>, vector<256x128xf32> -> vector<256x128xf32>
    %60 = arith.addf %54, %59 : vector<256x128xf32>
    %c0_46 = arith.constant 0 : index
    %c0_47 = arith.constant 0 : index
    %61 = vector.load %arg3[%c0_46, %c0_47] : memref<1x128xf32, #tpu.memory_space<vmem>>, vector<1x128xf32>
    %62 = vector.broadcast %61 : vector<1x128xf32> to vector<256x128xf32>
    %63 = arith.addf %60, %62 : vector<256x128xf32>
    %cst_48 = arith.constant 0.000000e+00 : f32
    %64 = vector.broadcast %cst_48 : f32 to vector<256x128xf32>
    %65 = arith.maximumf %63, %64 : vector<256x128xf32>
    %c0_49 = arith.constant 0 : index
    %c0_50 = arith.constant 0 : index
    %66 = vector.load %arg4[%c0_49, %c0_50] : memref<16x128xf32, #tpu.memory_space<vmem>>, vector<16x128xf32>
    %cst_51 = arith.constant dense<0.000000e+00> : vector<16x256xf32>
    %67 = tpu.matmul %66, %65, %cst_51 {dimension_numbers = #tpu.dot_dimension_numbers<[1], [1], [0], [0], [0, 0, 1, 0], [], []>} : vector<16x128xf32>, vector<256x128xf32>, vector<16x256xf32> -> vector<16x256xf32>
    %c0_52 = arith.constant 0 : index
    %c0_53 = arith.constant 0 : index
    %68 = vector.load %arg5[%c0_52, %c0_53] : memref<16x1xf32, #tpu.memory_space<vmem>>, vector<16x1xf32>
    %69 = vector.broadcast %68 : vector<16x1xf32> to vector<16x256xf32>
    %70 = arith.addf %67, %69 : vector<16x256xf32>
    %cst_54 = arith.constant 0.000000e+00 : f32
    %71 = vector.broadcast %cst_54 : f32 to vector<16x256xf32>
    %72 = arith.maximumf %70, %71 : vector<16x256xf32>
    %c0_55 = arith.constant 0 : index
    %c0_56 = arith.constant 0 : index
    %c0_57 = arith.constant 0 : index
    %73 = vector.load %arg6[%c0_55, %c0_56, %c0_57] : memref<1x16x256xf32, #tpu.memory_space<vmem>>, vector<1x16x256xf32>
    %74 = vector.shape_cast %73 : vector<1x16x256xf32> to vector<16x256xf32>
    %75 = vector.shape_cast %72 : vector<16x256xf32> to vector<1x16x256xf32>
    tpu.vector_store %arg6[%c0_55, %c0_56, %c0_57], %75 {strides = array<i32>} : memref<1x16x256xf32, #tpu.memory_space<vmem>>, vector<1x16x256xf32>,
    return
  }
  func.func @transform_0(%arg0: i32) -> (i32, i32, i32, i32) {
    %c0_i32 = arith.constant 0 : i32
    %c0_i32_0 = arith.constant 0 : i32
    %c0_i32_1 = arith.constant 0 : i32
    %c0_i32_2 = arith.constant 0 : i32
    return %arg0, %c0_i32, %c0_i32_0, %c0_i32_1 : i32, i32, i32, i32
  }
  func.func @transform_1(%arg0: i32) -> (i32, i32, i32) {
    %c0_i32 = arith.constant 0 : i32
    %c0_i32_0 = arith.constant 0 : i32
    %c0_i32_1 = arith.constant 0 : i32
    %c0_i32_2 = arith.constant 0 : i32
    return %c0_i32, %c0_i32_0, %c0_i32_1 : i32, i32, i32
  }
  func.func @transform_2(%arg0: i32) -> (i32, i32) {
    %c0_i32 = arith.constant 0 : i32
    %c0_i32_0 = arith.constant 0 : i32
    %c0_i32_1 = arith.constant 0 : i32
    return %c0_i32, %c0_i32_0 : i32, i32
  }
  func.func @transform_3(%arg0: i32) -> (i32, i32) {
    %c0_i32 = arith.constant 0 : i32
    %c0_i32_0 = arith.constant 0 : i32
    %c0_i32_1 = arith.constant 0 : i32
    return %c0_i32, %c0_i32_0 : i32, i32
  }
  func.func @transform_4(%arg0: i32) -> (i32, i32) {
    %c0_i32 = arith.constant 0 : i32
    %c0_i32_0 = arith.constant 0 : i32
    %c0_i32_1 = arith.constant 0 : i32
    return %c0_i32, %c0_i32_0 : i32, i32
  }
  func.func @transform_5(%arg0: i32) -> (i32, i32, i32) {
    %c0_i32 = arith.constant 0 : i32
    %c0_i32_0 = arith.constant 0 : i32
    %c0_i32_1 = arith.constant 0 : i32
    return %arg0, %c0_i32, %c0_i32_0 : i32, i32, i32
  }
}

</mosaic_0001>

<llo_original>
// kernel: bc_head_forward.1
$region0: #{bc_head_forward.1}
  #allocation0 [shape = 'u32[]', space=smem, size = 0x4, offset = 0x4, fixed_abs, tag = 'smem constant byte address 0x4 - core index']
  #allocation1 [shape = 'u32[72,128]{1,0:T(1,128)}', space=vmem, size = 0x9000, scoped, tag = 'internal scratch']
  #allocation2 [shape = 'f32[18,18,64]{2,1,0:T(8,128)}', space=vmem, size = 0x36000, scoped, tag = 'scratch operand']
  %s0 = inlined_call_operand.hbm [shape: f32[2,16,16,64], index: 0, kind: input, shape index: {}]
  %s1 = inlined_call_operand.hbm [shape: f32[9,64,128], index: 1, kind: input, shape index: {}]
  %s2 = inlined_call_operand.vmem [shape: f32[1,128], index: 2, kind: input, shape index: {}]
  %s3 = inlined_call_operand.vmem [shape: f32[16,128], index: 3, kind: input, shape index: {}]
  %s4 = inlined_call_operand.vmem [shape: f32[16,1], index: 4, kind: input, shape index: {}]
  %s5 = inlined_call_operand.vmem [shape: f32[2,16,256], index: 5, kind: output, shape index: {}]
  %s6 = sld [smem:[#allocation0]]
  $region61: #{bc_head_forward.1} parent=0
    _
  %s8 = ssub.s32 1, %s6
  %s9 = scalar_select 0, %s8, %s6
  $region1: #{bc_head_forward.1} parent=0
    #allocation3 [shape = 'u8[262144]{0}', space=vmem, size = 0x40000, scoped, tag = 'input window, operand 0']
    #allocation4 [shape = 's32[2]{0}', space=sflag, size = 0x8, scoped, tag = 'scoped memory for bc_head_forward.1']
    #allocation5 [shape = 'u8[294912]{0}', space=vmem, size = 0x48000, scoped, tag = 'input window, operand 1, single buffered']
    #allocation6 [shape = 's32[1]{0}', space=sflag, size = 0x4, scoped, tag = 'scoped memory for bc_head_forward.1']
    %10 = vsyncpa [#allocation4], 0
    %s11 = scalar_lea.sflag [#allocation4], 1
    %12 = vsyncpa %s11, 0
    %13 = vsyncpa [#allocation6], 0
    loop: start=0, step=1, limit=4
    $region2: #{bc_head_forward.1} parent=1 // loop_pre_header
      _
    $region3: #{bc_head_forward.1} parent=1 // loop_header
      %s15 = sphi 0, %s19
      %p16 = scmp.ge.s32.totalorder %s15, 4
      %s25 = sphi 0, %s27
      %s28 = sphi 0, %s25
      %s29 = sphi 0, %s28
      %s45 = sphi 0, %s29
      %s49 = sphi 0, %s49
      %s51 = sphi 0, %s49
      %s52 = sphi 0, %s51
      %s66 = sphi 0, %s52
      %s70 = sphi 0, %s70
      %s72 = sphi 0, %s70
      %s73 = sphi 0, %s72
      %s87 = sphi 0, %s73
      %s91 = sphi 0, %s91
      %s93 = sphi 0, %s91
      %s94 = sphi 0, %s93
      %s108 = sphi 0, %s94
      %s112 = sphi 0, %s112
      %s114 = sphi 0, %s112
      %s115 = sphi 0, %s114
      %s129 = sphi 0, %s115
      %s135 = sphi 0, %s137
      %s138 = sphi 0, %s135
      %s139 = sphi 0, %s138
      %s155 = sphi 0, %s139
    $region4: #{bc_head_forward.1} parent=1 // loop_header_branch
      %18 = sbr.rel (%p16) target = $region8
    $region5: #{bc_head_forward.1} parent=1 // loop_body
      %s20 = ssub.s32 %s15, 1
      %s21 = ssub.s32 %s15, 2
      %s22 = sadd.s32 %s15, 1
      %s23 = ssub.s32 %s15, %s22
      %p24 = scmp.eq.s32.totalorder %s23, 0
      %s26 = sadd.s32 %s25, 1
      %s27 = scalar_select %p24, %s25, %s26
      %p30 = pneg %p24
      %p31 = scmp.eq.s32.totalorder %s15, 1
      %p32 = por %p30, %p31
      %p33 = scmp.ne.s32.totalorder %s25, %s28
      %p34 = scmp.eq.s32.totalorder %s15, 0
      %p35 = por %p33, %p34
      %p36 = scmp.ne.s32.totalorder %s25, %s28
      %p37 = scmp.eq.s32.totalorder %s20, 1
      %p38 = por %p36, %p37
      %p39 = scmp.ne.s32.totalorder %s28, %s29
      %p40 = scmp.eq.s32.totalorder %s20, 0
      %p41 = por %p39, %p40
      %p42 = scmp.ne.s32.totalorder %s28, %s29
      %p43 = scmp.eq.s32.totalorder %s21, 1
      %p44 = por %p42, %p43
      %p46 = scmp.ne.s32.totalorder %s29, %s45
      %p47 = scmp.eq.s32.totalorder %s21, 0
      %p48 = por %p46, %p47
      %s50 = sadd.s32 %s49, 1
      %p53 = scmp.eq.s32.totalorder %s15, 1
      %p54 = scmp.ne.s32.totalorder %s49, %s51
      %p55 = scmp.eq.s32.totalorder %s15, 0
      %p56 = por %p54, %p55
      %p57 = scmp.ne.s32.totalorder %s49, %s51
      %p58 = scmp.eq.s32.totalorder %s20, 1
      %p59 = por %p57, %p58
      %p60 = scmp.ne.s32.totalorder %s51, %s52
      %p61 = scmp.eq.s32.totalorder %s20, 0
      %p62 = por %p60, %p61
      %p63 = scmp.ne.s32.totalorder %s51, %s52
      %p64 = scmp.eq.s32.totalorder %s21, 1
      %p65 = por %p63, %p64
      %p67 = scmp.ne.s32.totalorder %s52, %s66
      %p68 = scmp.eq.s32.totalorder %s21, 0
      %p69 = por %p67, %p68
      %s71 = sadd.s32 %s70, 1
      %p74 = scmp.eq.s32.totalorder %s15, 1
      %p75 = scmp.ne.s32.totalorder %s70, %s72
      %p76 = scmp.eq.s32.totalorder %s15, 0
      %p77 = por %p75, %p76
      %p78 = scmp.ne.s32.totalorder %s70, %s72
      %p79 = scmp.eq.s32.totalorder %s20, 1
      %p80 = por %p78, %p79
      %p81 = scmp.ne.s32.totalorder %s72, %s73
      %p82 = scmp.eq.s32.totalorder %s20, 0
      %p83 = por %p81, %p82
      %p84 = scmp.ne.s32.totalorder %s72, %s73
      %p85 = scmp.eq.s32.totalorder %s21, 1
      %p86 = por %p84, %p85
      %p88 = scmp.ne.s32.totalorder %s73, %s87
      %p89 = scmp.eq.s32.totalorder %s21, 0
      %p90 = por %p88, %p89
      %s92 = sadd.s32 %s91, 1
      %p95 = scmp.eq.s32.totalorder %s15, 1
      %p96 = scmp.ne.s32.totalorder %s91, %s93
      %p97 = scmp.eq.s32.totalorder %s15, 0
      %p98 = por %p96, %p97
      %p99 = scmp.ne.s32.totalorder %s91, %s93
      %p100 = scmp.eq.s32.totalorder %s20, 1
      %p101 = por %p99, %p100
      %p102 = scmp.ne.s32.totalorder %s93, %s94
      %p103 = scmp.eq.s32.totalorder %s20, 0
      %p104 = por %p102, %p103
      %p105 = scmp.ne.s32.totalorder %s93, %s94
      %p106 = scmp.eq.s32.totalorder %s21, 1
      %p107 = por %p105, %p106
      %p109 = scmp.ne.s32.totalorder %s94, %s108
      %p110 = scmp.eq.s32.totalorder %s21, 0
      %p111 = por %p109, %p110
      %s113 = sadd.s32 %s112, 1
      %p116 = scmp.eq.s32.totalorder %s15, 1
      %p117 = scmp.ne.s32.totalorder %s112, %s114
      %p118 = scmp.eq.s32.totalorder %s15, 0
      %p119 = por %p117, %p118
      %p120 = scmp.ne.s32.totalorder %s112, %s114
      %p121 = scmp.eq.s32.totalorder %s20, 1
      %p122 = por %p120, %p121
      %p123 = scmp.ne.s32.totalorder %s114, %s115
      %p124 = scmp.eq.s32.totalorder %s20, 0
      %p125 = por %p123, %p124
      %p126 = scmp.ne.s32.totalorder %s114, %s115
      %p127 = scmp.eq.s32.totalorder %s21, 1
      %p128 = por %p126, %p127
      %p130 = scmp.ne.s32.totalorder %s115, %s129
      %p131 = scmp.eq.s32.totalorder %s21, 0
      %p132 = por %p130, %p131
      %s133 = ssub.s32 %s15, %s22
      %p134 = scmp.eq.s32.totalorder %s133, 0
      %s136 = sadd.s32 %s135, 1
      %s137 = scalar_select %p134, %s135, %s136
      %p140 = pneg %p134
      %p141 = scmp.eq.s32.totalorder %s15, 1
      %p142 = por %p140, %p141
      %p143 = scmp.ne.s32.totalorder %s135, %s138
      %p144 = scmp.eq.s32.totalorder %s15, 0
      %p145 = por %p143, %p144
      %p146 = scmp.ne.s32.totalorder %s135, %s138
      %p147 = scmp.eq.s32.totalorder %s20, 1
      %p148 = por %p146, %p147
      %p149 = scmp.ne.s32.totalorder %s138, %s139
      %p150 = scmp.eq.s32.totalorder %s20, 0
      %p151 = por %p149, %p150
      %p152 = scmp.ne.s32.totalorder %s138, %s139
      %p153 = scmp.eq.s32.totalorder %s21, 1
      %p154 = por %p152, %p153
      %p156 = scmp.ne.s32.totalorder %s139, %s155
      %p157 = scmp.eq.s32.totalorder %s21, 0
      %p158 = por %p156, %p157
      %p159 = scmp.le.s32.totalorder 1, %s15
      %p160 = scmp.lt.s32.totalorder %s15, 3
      %p161 = pnand %p159, %p160
      %p162 = pneg %p161
      // Predicated region
      $region9: #{bc_head_forward.1} parent=5 // pred_check
        _
      $region10: #{bc_head_forward.1} parent=5 // pred_check_branch
        %164 = sbr.rel (%p161) target = $region12
      $region11: #{bc_head_forward.1} parent=5 // pred_region
        %s165 = ssub.s32 %s15, 1
        // Predicated region
        $region13: #{bc_head_forward.1} parent=11 // pred_check
          %p166 = pneg %p62
        $region14: #{bc_head_forward.1} parent=11 // pred_check_branch
          %168 = sbr.rel (%p166) target = $region16
        $region15: #{bc_head_forward.1} parent=11 // pred_region
          %170 = vsyncadd [#allocation6], 0
          %s171 = sshll.u32 %s1, 4
          %s172 = int_to_ptr.hbm [resolvable:$true] %s171
          %s173 = sshll.u32 [#allocation5], 4
          %s174 = int_to_ptr.vmem [resolvable:$true] %s173
          %179 = dma.hbm_to_vmem [thread:$0]  %s172, 9216, %s174, [#allocation6], 128, 128, 8
        $region16: #{bc_head_forward.1} parent=11 // pred_fallthru
          _
        // Predicated region
        $region17: #{bc_head_forward.1} parent=11 // pred_check
          %p180 = pneg %p83
        $region18: #{bc_head_forward.1} parent=11 // pred_check_branch
          %182 = sbr.rel (%p180) target = $region20
        $region19: #{bc_head_forward.1} parent=11 // pred_region
          _
        $region20: #{bc_head_forward.1} parent=11 // pred_fallthru
          _
        // Predicated region
        $region21: #{bc_head_forward.1} parent=11 // pred_check
          %p183 = pneg %p104
        $region22: #{bc_head_forward.1} parent=11 // pred_check_branch
          %185 = sbr.rel (%p183) target = $region24
        $region23: #{bc_head_forward.1} parent=11 // pred_region
          _
        $region24: #{bc_head_forward.1} parent=11 // pred_fallthru
          _
        // Predicated region
        $region25: #{bc_head_forward.1} parent=11 // pred_check
          %p186 = pneg %p125
        $region26: #{bc_head_forward.1} parent=11 // pred_check_branch
          %188 = sbr.rel (%p186) target = $region28
        $region27: #{bc_head_forward.1} parent=11 // pred_region
          _
        $region28: #{bc_head_forward.1} parent=11 // pred_fallthru
          _
      $region12: #{bc_head_forward.1} parent=5 // pred_fallthru
        _
      %p189 = scmp.lt.s32.totalorder %s15, 2
      // Predicated region
      $region29: #{bc_head_forward.1} parent=5 // pred_check
        %p190 = pneg %p189
      $region30: #{bc_head_forward.1} parent=5 // pred_check_branch
        %192 = sbr.rel (%p190) target = $region32
      $region31: #{bc_head_forward.1} parent=5 // pred_region
        // Predicated region
        $region33: #{bc_head_forward.1} parent=31 // pred_check
          %p193 = pneg %p35
        $region34: #{bc_head_forward.1} parent=31 // pred_check_branch
          %195 = sbr.rel (%p193) target = $region36
        $region35: #{bc_head_forward.1} parent=31 // pred_region
          %s196 = sand.u32 %s25, 1
          %s197 = scalar_lea.sflag [#allocation4], %s196
          %s198 = sand.u32 %s25, 1
          %s199 = smul.addr %s198, 256
          %s200 = scalar_lea.vmem [#allocation3], %s199
          %202 = vsyncadd %s197, 0
          %s203 = smul.addr %s15, 32
          %s204 = smul.addr %s203, 8
          %s205 = scalar_lea.hbm %s0, %s204
          %s206 = sshll.u32 %s205, 4
          %s207 = int_to_ptr.hbm [resolvable:$true] %s206
          %s208 = sshll.u32 %s200, 4
          %s209 = int_to_ptr.vmem [resolvable:$true] %s208
          %214 = dma.hbm_to_vmem [thread:$0]  %s207, 4096, %s209, %s197, 128, 128, 8
        $region36: #{bc_head_forward.1} parent=31 // pred_fallthru
          _
      $region32: #{bc_head_forward.1} parent=5 // pred_fallthru
        _
      %p215 = scmp.le.s32.totalorder 1, %s15
      %p216 = scmp.lt.s32.totalorder %s15, 3
      %p217 = pnand %p215, %p216
      %p218 = pneg %p217
      // Predicated region
      $region37: #{bc_head_forward.1} parent=5 // pred_check
        _
      $region38: #{bc_head_forward.1} parent=5 // pred_check_branch
        %220 = sbr.rel (%p217) target = $region40
      $region39: #{bc_head_forward.1} parent=5 // pred_region
        %s221 = ssub.s32 %s15, 1
        %s222 = sand.u32 %s28, 1
        %s223 = scalar_lea.sflag [#allocation4], %s222
        %s224 = sand.u32 %s28, 1
        %s225 = smul.addr %s224, 256
        %s226 = scalar_lea.vmem [#allocation3], %s225
        // Predicated region
        $region41: #{bc_head_forward.1} parent=39 // pred_check
          %p227 = pneg %p41
        $region42: #{bc_head_forward.1} parent=39 // pred_check_branch
          %229 = sbr.rel (%p227) target = $region44
        $region43: #{bc_head_forward.1} parent=39 // pred_region
          %231 = dma.done %s223, 4096
        $region44: #{bc_head_forward.1} parent=39 // pred_fallthru
          _
        // Predicated region
        $region45: #{bc_head_forward.1} parent=39 // pred_check
          %p232 = pneg %p62
        $region46: #{bc_head_forward.1} parent=39 // pred_check_branch
          %234 = sbr.rel (%p232) target = $region48
        $region47: #{bc_head_forward.1} parent=39 // pred_region
          %236 = dma.done [#allocation6], 9216
        $region48: #{bc_head_forward.1} parent=39 // pred_fallthru
          _
        %s237 = sand.u32 %s28, 1
        %s238 = scalar_lea.sflag [#allocation4], %s237
        %s239 = sand.u32 %s28, 1
        %s240 = smul.addr %s239, 256
        %s241 = scalar_lea.vmem [#allocation3], %s240
        %p242 = pneg %p41
        %p243 = pneg %p38
        %p244 = pneg %p62
        %p245 = pneg %p59
        %p246 = pneg %p83
        %p247 = pneg %p80
        %p248 = pneg %p104
        %p249 = pneg %p101
        %p250 = pneg %p125
        %p251 = pneg %p122
        %p252 = pneg %p151
        %p253 = pneg %p148
        %p254 = scmp.lt.s32.totalorder %s20, 1
        %s255 = scalar_select %p254, %s20, 1
        %s256 = smul.addr %s255, 4
        %s257 = smul.addr %s256, 8
        %s258 = scalar_lea.vmem %s5, %s257
        %p259 = scmp.lt.s32.totalorder %s20, 1
        %s260 = scalar_select %p259, %s20, 1
        %s261 = smul.addr %s260, 4
        %s262 = smul.addr %s261, 8
        %s263 = scalar_lea.vmem %s5, %s262
        %vm264 = vcmask 523264
        %265 = vst.msk [vmem:[#allocation2] sm:$0xff] %vm264, 0.0
        %266 = vst.msk [vmem:[#allocation2 + $0x8] sm:$0xff] %vm264, 0.0
        %vm267 = vcmask 517120
        %268 = vst.msk [vmem:[#allocation2 + $0x10] sm:$0x3] %vm267, 0.0
        %269 = vst.msk [vmem:[#allocation2 + $0x18] sm:$0xff] %vm264, 0.0
        %270 = vst.msk [vmem:[#allocation2 + $0x20] sm:$0xff] %vm264, 0.0
        %271 = vst.msk [vmem:[#allocation2 + $0x28] sm:$0x3] %vm267, 0.0
        %272 = vst.msk [vmem:[#allocation2 + $0x30] sm:$0xff] %vm264, 0.0
        %273 = vst.msk [vmem:[#allocation2 + $0x38] sm:$0xff] %vm264, 0.0
        %274 = vst.msk [vmem:[#allocation2 + $0x40] sm:$0x3] %vm267, 0.0
        %275 = vst.msk [vmem:[#allocation2 + $0x48] sm:$0xff] %vm264, 0.0
        %276 = vst.msk [vmem:[#allocation2 + $0x50] sm:$0xff] %vm264, 0.0
        %277 = vst.msk [vmem:[#allocation2 + $0x58] sm:$0x3] %vm267, 0.0
        %278 = vst.msk [vmem:[#allocation2 + $0x60] sm:$0xff] %vm264, 0.0
        %279 = vst.msk [vmem:[#allocation2 + $0x68] sm:$0xff] %vm264, 0.0
        %280 = vst.msk [vmem:[#allocation2 + $0x70] sm:$0x3] %vm267, 0.0
        %281 = vst.msk [vmem:[#allocation2 + $0x78] sm:$0xff] %vm264, 0.0
        %282 = vst.msk [vmem:[#allocation2 + $0x80] sm:$0xff] %vm264, 0.0
        %283 = vst.msk [vmem:[#allocation2 + $0x88] sm:$0x3] %vm267, 0.0
        %284 = vst.msk [vmem:[#allocation2 + $0x90] sm:$0xff] %vm264, 0.0
        %285 = vst.msk [vmem:[#allocation2 + $0x98] sm:$0xff] %vm264, 0.0
        %286 = vst.msk [vmem:[#allocation2 + $0xa0] sm:$0x3] %vm267, 0.0
        %287 = vst.msk [vmem:[#allocation2 + $0xa8] sm:$0xff] %vm264, 0.0
        %288 = vst.msk [vmem:[#allocation2 + $0xb0] sm:$0xff] %vm264, 0.0
        %289 = vst.msk [vmem:[#allocation2 + $0xb8] sm:$0x3] %vm267, 0.0
        %290 = vst.msk [vmem:[#allocation2 + $0xc0] sm:$0xff] %vm264, 0.0
        %291 = vst.msk [vmem:[#allocation2 + $0xc8] sm:$0xff] %vm264, 0.0
        %292 = vst.msk [vmem:[#allocation2 + $0xd0] sm:$0x3] %vm267, 0.0
        %293 = vst.msk [vmem:[#allocation2 + $0xd8] sm:$0xff] %vm264, 0.0
        %294 = vst.msk [vmem:[#allocation2 + $0xe0] sm:$0xff] %vm264, 0.0
        %295 = vst.msk [vmem:[#allocation2 + $0xe8] sm:$0x3] %vm267, 0.0
        %296 = vst.msk [vmem:[#allocation2 + $0xf0] sm:$0xff] %vm264, 0.0
        %297 = vst.msk [vmem:[#allocation2 + $0xf8] sm:$0xff] %vm264, 0.0
        %298 = vst.msk [vmem:[#allocation2 + $0x100] sm:$0x3] %vm267, 0.0
        %299 = vst.msk [vmem:[#allocation2 + $0x108] sm:$0xff] %vm264, 0.0
        %300 = vst.msk [vmem:[#allocation2 + $0x110] sm:$0xff] %vm264, 0.0
        %301 = vst.msk [vmem:[#allocation2 + $0x118] sm:$0x3] %vm267, 0.0
        %302 = vst.msk [vmem:[#allocation2 + $0x120] sm:$0xff] %vm264, 0.0
        %303 = vst.msk [vmem:[#allocation2 + $0x128] sm:$0xff] %vm264, 0.0
        %304 = vst.msk [vmem:[#allocation2 + $0x130] sm:$0x3] %vm267, 0.0
        %305 = vst.msk [vmem:[#allocation2 + $0x138] sm:$0xff] %vm264, 0.0
        %306 = vst.msk [vmem:[#allocation2 + $0x140] sm:$0xff] %vm264, 0.0
        %307 = vst.msk [vmem:[#allocation2 + $0x148] sm:$0x3] %vm267, 0.0
        %308 = vst.msk [vmem:[#allocation2 + $0x150] sm:$0xff] %vm264, 0.0
        %309 = vst.msk [vmem:[#allocation2 + $0x158] sm:$0xff] %vm264, 0.0
        %310 = vst.msk [vmem:[#allocation2 + $0x160] sm:$0x3] %vm267, 0.0
        %311 = vst.msk [vmem:[#allocation2 + $0x168] sm:$0xff] %vm264, 0.0
        %312 = vst.msk [vmem:[#allocation2 + $0x170] sm:$0xff] %vm264, 0.0
        %313 = vst.msk [vmem:[#allocation2 + $0x178] sm:$0x3] %vm267, 0.0
        %314 = vst.msk [vmem:[#allocation2 + $0x180] sm:$0xff] %vm264, 0.0
        %315 = vst.msk [vmem:[#allocation2 + $0x188] sm:$0xff] %vm264, 0.0
        %316 = vst.msk [vmem:[#allocation2 + $0x190] sm:$0x3] %vm267, 0.0
        %317 = vst.msk [vmem:[#allocation2 + $0x198] sm:$0xff] %vm264, 0.0
        %318 = vst.msk [vmem:[#allocation2 + $0x1a0] sm:$0xff] %vm264, 0.0
        %319 = vst.msk [vmem:[#allocation2 + $0x1a8] sm:$0x3] %vm267, 0.0
        %v320 = vld [vmem:[%s226] sm:$0xff]
        %v321 = vld [vmem:[%s226 + $0x8] sm:$0xff]
        %v322 = vld [vmem:[%s226 + $0x10] sm:$0xff]
        %v323 = vld [vmem:[%s226 + $0x18] sm:$0xff]
        %v324 = vld [vmem:[%s226 + $0x20] sm:$0xff]
        %v325 = vld [vmem:[%s226 + $0x28] sm:$0xff]
        %v326 = vld [vmem:[%s226 + $0x30] sm:$0xff]
        %v327 = vld [vmem:[%s226 + $0x38] sm:$0xff]
        %v328 = vld [vmem:[%s226 + $0x40] sm:$0xff]
        %v329 = vld [vmem:[%s226 + $0x48] sm:$0xff]
        %v330 = vld [vmem:[%s226 + $0x50] sm:$0xff]
        %v331 = vld [vmem:[%s226 + $0x58] sm:$0xff]
        %v332 = vld [vmem:[%s226 + $0x60] sm:$0xff]
        %v333 = vld [vmem:[%s226 + $0x68] sm:$0xff]
        %v334 = vld [vmem:[%s226 + $0x70] sm:$0xff]
        %v335 = vld [vmem:[%s226 + $0x78] sm:$0xff]
        %v336 = vld [vmem:[%s226 + $0x80] sm:$0xff]
        %v337 = vld [vmem:[%s226 + $0x88] sm:$0xff]
        %v338 = vld [vmem:[%s226 + $0x90] sm:$0xff]
        %v339 = vld [vmem:[%s226 + $0x98] sm:$0xff]
        %v340 = vld [vmem:[%s226 + $0xa0] sm:$0xff]
        %v341 = vld [vmem:[%s226 + $0xa8] sm:$0xff]
        %v342 = vld [vmem:[%s226 + $0xb0] sm:$0xff]
        %v343 = vld [vmem:[%s226 + $0xb8] sm:$0xff]
        %v344 = vld [vmem:[%s226 + $0xc0] sm:$0xff]
        %v345 = vld [vmem:[%s226 + $0xc8] sm:$0xff]
        %v346 = vld [vmem:[%s226 + $0xd0] sm:$0xff]
        %v347 = vld [vmem:[%s226 + $0xd8] sm:$0xff]
        %v348 = vld [vmem:[%s226 + $0xe0] sm:$0xff]
        %v349 = vld [vmem:[%s226 + $0xe8] sm:$0xff]
        %v350 = vld [vmem:[%s226 + $0xf0] sm:$0xff]
        %v351 = vld [vmem:[%s226 + $0xf8] sm:$0xff]
        %s352 = scalar_lea.vmem [#allocation2], 24
        %353 = vst.msk [vmem:[%s352 + $0x1] sm:$0xff] %vm264, %v320
        %354 = vst.msk [vmem:[%s352 + $0x9] sm:$0xff] %vm264, %v321
        %355 = vst.msk [vmem:[%s352 + $0x19] sm:$0xff] %vm264, %v322
        %356 = vst.msk [vmem:[%s352 + $0x21] sm:$0xff] %vm264, %v323
        %357 = vst.msk [vmem:[%s352 + $0x31] sm:$0xff] %vm264, %v324
        %358 = vst.msk [vmem:[%s352 + $0x39] sm:$0xff] %vm264, %v325
        %359 = vst.msk [vmem:[%s352 + $0x49] sm:$0xff] %vm264, %v326
        %360 = vst.msk [vmem:[%s352 + $0x51] sm:$0xff] %vm264, %v327
        %361 = vst.msk [vmem:[%s352 + $0x61] sm:$0xff] %vm264, %v328
        %362 = vst.msk [vmem:[%s352 + $0x69] sm:$0xff] %vm264, %v329
        %363 = vst.msk [vmem:[%s352 + $0x79] sm:$0xff] %vm264, %v330
        %364 = vst.msk [vmem:[%s352 + $0x81] sm:$0xff] %vm264, %v331
        %365 = vst.msk [vmem:[%s352 + $0x91] sm:$0xff] %vm264, %v332
        %366 = vst.msk [vmem:[%s352 + $0x99] sm:$0xff] %vm264, %v333
        %367 = vst.msk [vmem:[%s352 + $0xa9] sm:$0xff] %vm264, %v334
        %368 = vst.msk [vmem:[%s352 + $0xb1] sm:$0xff] %vm264, %v335
        %369 = vst.msk [vmem:[%s352 + $0xc1] sm:$0xff] %vm264, %v336
        %370 = vst.msk [vmem:[%s352 + $0xc9] sm:$0xff] %vm264, %v337
        %371 = vst.msk [vmem:[%s352 + $0xd9] sm:$0xff] %vm264, %v338
        %372 = vst.msk [vmem:[%s352 + $0xe1] sm:$0xff] %vm264, %v339
        %373 = vst.msk [vmem:[%s352 + $0xf1] sm:$0xff] %vm264, %v340
        %374 = vst.msk [vmem:[%s352 + $0xf9] sm:$0xff] %vm264, %v341
        %375 = vst.msk [vmem:[%s352 + $0x109] sm:$0xff] %vm264, %v342
        %376 = vst.msk [vmem:[%s352 + $0x111] sm:$0xff] %vm264, %v343
        %377 = vst.msk [vmem:[%s352 + $0x121] sm:$0xff] %vm264, %v344
        %378 = vst.msk [vmem:[%s352 + $0x129] sm:$0xff] %vm264, %v345
        %379 = vst.msk [vmem:[%s352 + $0x139] sm:$0xff] %vm264, %v346
        %380 = vst.msk [vmem:[%s352 + $0x141] sm:$0xff] %vm264, %v347
        %381 = vst.msk [vmem:[%s352 + $0x151] sm:$0xff] %vm264, %v348
        %382 = vst.msk [vmem:[%s352 + $0x159] sm:$0xff] %vm264, %v349
        %383 = vst.msk [vmem:[%s352 + $0x169] sm:$0xff] %vm264, %v350
        %384 = vst.msk [vmem:[%s352 + $0x171] sm:$0xff] %vm264, %v351
        %v385 = vld [vmem:[#allocation2] sm:$0xff]
        %v386 = vld [vmem:[#allocation2 + $0x8] sm:$0xff]
        %v387 = vld [vmem:[#allocation2 + $0x18] sm:$0xff]
        %v388 = vld [vmem:[#allocation2 + $0x20] sm:$0xff]
        %v389 = vld [vmem:[#allocation2 + $0x30] sm:$0xff]
        %v390 = vld [vmem:[#allocation2 + $0x38] sm:$0xff]
        %v391 = vld [vmem:[#allocation2 + $0x48] sm:$0xff]
        %v392 = vld [vmem:[#allocation2 + $0x50] sm:$0xff]
        %v393 = vld [vmem:[#allocation2 + $0x60] sm:$0xff]
        %v394 = vld [vmem:[#allocation2 + $0x68] sm:$0xff]
        %v395 = vld [vmem:[#allocation2 + $0x78] sm:$0xff]
        %v396 = vld [vmem:[#allocation2 + $0x80] sm:$0xff]
        %v397 = vld [vmem:[#allocation2 + $0x90] sm:$0xff]
        %v398 = vld [vmem:[#allocation2 + $0x98] sm:$0xff]
        %v399 = vld [vmem:[#allocation2 + $0xa8] sm:$0xff]
        %v400 = vld [vmem:[#allocation2 + $0xb0] sm:$0xff]
        %v401 = vld [vmem:[#allocation2 + $0xc0] sm:$0xff]
        %v402 = vld [vmem:[#allocation2 + $0xc8] sm:$0xff]
        %v403 = vld [vmem:[#allocation2 + $0xd8] sm:$0xff]
        %v404 = vld [vmem:[#allocation2 + $0xe0] sm:$0xff]
        %v405 = vld [vmem:[#allocation2 + $0xf0] sm:$0xff]
        %v406 = vld [vmem:[#allocation2 + $0xf8] sm:$0xff]
        %v407 = vld [vmem:[#allocation2 + $0x108] sm:$0xff]
        %v408 = vld [vmem:[#allocation2 + $0x110] sm:$0xff]
        %v409 = vld [vmem:[#allocation2 + $0x120] sm:$0xff]
        %v410 = vld [vmem:[#allocation2 + $0x128] sm:$0xff]
        %v411 = vld [vmem:[#allocation2 + $0x138] sm:$0xff]
        %v412 = vld [vmem:[#allocation2 + $0x140] sm:$0xff]
        %v413 = vld [vmem:[#allocation2 + $0x150] sm:$0xff]
        %v414 = vld [vmem:[#allocation2 + $0x158] sm:$0xff]
        %v415 = vld [vmem:[#allocation2 + $0x168] sm:$0xff]
        %v416 = vld [vmem:[#allocation2 + $0x170] sm:$0xff]
        %v417 = vld [vmem:[#allocation2 + $0x180] sm:$0xff]
        %v418 = vld [vmem:[#allocation2 + $0x188] sm:$0xff]
        %v419 = vld [vmem:[#allocation2 + $0x198] sm:$0xff]
        %v420 = vld [vmem:[#allocation2 + $0x1a0] sm:$0xff]
        %v421 = vld [vmem:[#allocation5] sm:$0xff]
        %v422 = vld [vmem:[#allocation5 + $0x8] sm:$0xff]
        %v423 = vld [vmem:[#allocation5 + $0x10] sm:$0xff]
        %v424 = vld [vmem:[#allocation5 + $0x18] sm:$0xff]
        %v425 = vld [vmem:[#allocation5 + $0x20] sm:$0xff]
        %v426 = vld [vmem:[#allocation5 + $0x28] sm:$0xff]
        %v427 = vld [vmem:[#allocation5 + $0x30] sm:$0xff]
        %v428 = vld [vmem:[#allocation5 + $0x38] sm:$0xff]
        %s429 = scalar_lea.vmem [#allocation5], 192
        %v430 = vld [vmem:[%s429] sm:$0xff]
        %v431 = vld [vmem:[%s429 + $0x8] sm:$0xff]
        %v432 = vld [vmem:[%s429 + $0x10] sm:$0xff]
        %v433 = vld [vmem:[%s429 + $0x18] sm:$0xff]
        %v434 = vld [vmem:[%s429 + $0x20] sm:$0xff]
        %v435 = vld [vmem:[%s429 + $0x28] sm:$0xff]
        %v436 = vld [vmem:[%s429 + $0x30] sm:$0xff]
        %v437 = vld [vmem:[%s429 + $0x38] sm:$0xff]
        %v439 = vsel %vm264, %v387, 0
        %v442 = vsel %vm264, %v388, 0
        %v445 = vsel %vm264, %v389, 0
        %v448 = vsel %vm264, %v390, 0
        %v451 = vsel %vm264, %v391, 0
        %v454 = vsel %vm264, %v392, 0
        %v457 = vsel %vm264, %v393, 0
        %v460 = vsel %vm264, %v394, 0
        %v463 = vsel %vm264, %v395, 0
        %v466 = vsel %vm264, %v396, 0
        %v469 = vsel %vm264, %v397, 0
        %v472 = vsel %vm264, %v398, 0
        %v475 = vsel %vm264, %v399, 0
        %v478 = vsel %vm264, %v400, 0
        %v481 = vsel %vm264, %v401, 0
        %v484 = vsel %vm264, %v402, 0
        %v487 = vsel %vm264, %v403, 0
        %v490 = vsel %vm264, %v404, 0
        %v493 = vsel %vm264, %v405, 0
        %v496 = vsel %vm264, %v406, 0
        %v499 = vsel %vm264, %v407, 0
        %v502 = vsel %vm264, %v408, 0
        %v505 = vsel %vm264, %v409, 0
        %v508 = vsel %vm264, %v410, 0
        %v511 = vsel %vm264, %v411, 0
        %v514 = vsel %vm264, %v412, 0
        %v517 = vsel %vm264, %v413, 0
        %v520 = vsel %vm264, %v414, 0
        %v523 = vsel %vm264, %v415, 0
        %v526 = vsel %vm264, %v416, 0
        %v529 = vsel %vm264, %v417, 0
        %v532 = vsel %vm264, %v418, 0
        %534 = vmatpush.msra.mxu0 0.0
        %535 = vmatpush.msra.mxu0 0.0
        %536 = vmatpush.msra.mxu0 0.0
        %537 = vmatpush.msra.mxu0 0.0
        %538 = vmatpush.msra.mxu0 0.0
        %539 = vmatpush.msra.mxu0 0.0
        %540 = vmatpush.msra.mxu0 0.0
        %541 = vmatpush.msra.mxu0 0.0
        %542 = vmatpush.msra.mxu0 %v437
        %543 = vmatpush.msra.mxu0 %v436
        %544 = vmatpush.msra.mxu0 %v435
        %545 = vmatpush.msra.mxu0 %v434
        %546 = vmatpush.msra.mxu0 %v433
        %547 = vmatpush.msra.mxu0 %v432
        %548 = vmatpush.msra.mxu0 %v431
        %549 = vmatpush.msra.mxu0 %v430
        %550 = vmatmul.f32.gmra.mxu0 %v439
        %v551 = vpop.f32.mrf.mxu0
        %v552 = vadd.f32 0.0, %v551
        %553 = vmatmul.f32.gmra.mxu0 %v442
        %v554 = vpop.f32.mrf.mxu0
        %v555 = vadd.f32 0.0, %v554
        %556 = vmatmul.f32.gmra.mxu0 %v445
        %v557 = vpop.f32.mrf.mxu0
        %v558 = vadd.f32 0.0, %v557
        %559 = vmatmul.f32.gmra.mxu0 %v448
        %v560 = vpop.f32.mrf.mxu0
        %v561 = vadd.f32 0.0, %v560
        %562 = vmatmul.f32.gmra.mxu0 %v451
        %v563 = vpop.f32.mrf.mxu0
        %v564 = vadd.f32 0.0, %v563
        %565 = vmatmul.f32.gmra.mxu0 %v454
        %v566 = vpop.f32.mrf.mxu0
        %v567 = vadd.f32 0.0, %v566
        %568 = vmatmul.f32.gmra.mxu0 %v457
        %v569 = vpop.f32.mrf.mxu0
        %v570 = vadd.f32 0.0, %v569
        %571 = vmatmul.f32.gmra.mxu0 %v460
        %v572 = vpop.f32.mrf.mxu0
        %v573 = vadd.f32 0.0, %v572
        %574 = vmatmul.f32.gmra.mxu0 %v463
        %v575 = vpop.f32.mrf.mxu0
        %v576 = vadd.f32 0.0, %v575
        %577 = vmatmul.f32.gmra.mxu0 %v466
        %v578 = vpop.f32.mrf.mxu0
        %v579 = vadd.f32 0.0, %v578
        %580 = vmatmul.f32.gmra.mxu0 %v469
        %v581 = vpop.f32.mrf.mxu0
        %v582 = vadd.f32 0.0, %v581
        %583 = vmatmul.f32.gmra.mxu0 %v472
        %v584 = vpop.f32.mrf.mxu0
        %v585 = vadd.f32 0.0, %v584
        %586 = vmatmul.f32.gmra.mxu0 %v475
        %v587 = vpop.f32.mrf.mxu0
        %v588 = vadd.f32 0.0, %v587
        %589 = vmatmul.f32.gmra.mxu0 %v478
        %v590 = vpop.f32.mrf.mxu0
        %v591 = vadd.f32 0.0, %v590
        %592 = vmatmul.f32.gmra.mxu0 %v481
        %v593 = vpop.f32.mrf.mxu0
        %v594 = vadd.f32 0.0, %v593
        %595 = vmatmul.f32.gmra.mxu0 %v484
        %v596 = vpop.f32.mrf.mxu0
        %v597 = vadd.f32 0.0, %v596
        %598 = vmatmul.f32.gmra.mxu0 %v487
        %v599 = vpop.f32.mrf.mxu0
        %v600 = vadd.f32 0.0, %v599
        %601 = vmatmul.f32.gmra.mxu0 %v490
        %v602 = vpop.f32.mrf.mxu0
        %v603 = vadd.f32 0.0, %v602
        %604 = vmatmul.f32.gmra.mxu0 %v493
        %v605 = vpop.f32.mrf.mxu0
        %v606 = vadd.f32 0.0, %v605
        %607 = vmatmul.f32.gmra.mxu0 %v496
        %v608 = vpop.f32.mrf.mxu0
        %v609 = vadd.f32 0.0, %v608
        %610 = vmatmul.f32.gmra.mxu0 %v499
        %v611 = vpop.f32.mrf.mxu0
        %v612 = vadd.f32 0.0, %v611
        %613 = vmatmul.f32.gmra.mxu0 %v502
        %v614 = vpop.f32.mrf.mxu0
        %v615 = vadd.f32 0.0, %v614
        %616 = vmatmul.f32.gmra.mxu0 %v505
        %v617 = vpop.f32.mrf.mxu0
        %v618 = vadd.f32 0.0, %v617
        %619 = vmatmul.f32.gmra.mxu0 %v508
        %v620 = vpop.f32.mrf.mxu0
        %v621 = vadd.f32 0.0, %v620
        %622 = vmatmul.f32.gmra.mxu0 %v511
        %v623 = vpop.f32.mrf.mxu0
        %v624 = vadd.f32 0.0, %v623
        %625 = vmatmul.f32.gmra.mxu0 %v514
        %v626 = vpop.f32.mrf.mxu0
        %v627 = vadd.f32 0.0, %v626
        %628 = vmatmul.f32.gmra.mxu0 %v517
        %v629 = vpop.f32.mrf.mxu0
        %v630 = vadd.f32 0.0, %v629
        %631 = vmatmul.f32.gmra.mxu0 %v520
        %v632 = vpop.f32.mrf.mxu0
        %v633 = vadd.f32 0.0, %v632
        %634 = vmatmul.f32.gmra.mxu0 %v523
        %v635 = vpop.f32.mrf.mxu0
        %v636 = vadd.f32 0.0, %v635
        %637 = vmatmul.f32.gmra.mxu0 %v526
        %v638 = vpop.f32.mrf.mxu0
        %v639 = vadd.f32 0.0, %v638
        %640 = vmatmul.f32.gmra.mxu0 %v529
        %v641 = vpop.f32.mrf.mxu0
        %v642 = vadd.f32 0.0, %v641
        %643 = vmatmul.f32.gmra.mxu0 %v532
        %v644 = vpop.f32.mrf.mxu0
        %v645 = vadd.f32 0.0, %v644
        %646 = vdwg.mxu0
        %v648 = vsel %vm264, %v385, 0
        %v651 = vsel %vm264, %v386, 0
        %653 = vmatpush.msra.mxu0 0.0
        %654 = vmatpush.msra.mxu0 0.0
        %655 = vmatpush.msra.mxu0 0.0
        %656 = vmatpush.msra.mxu0 0.0
        %657 = vmatpush.msra.mxu0 0.0
        %658 = vmatpush.msra.mxu0 0.0
        %659 = vmatpush.msra.mxu0 0.0
        %660 = vmatpush.msra.mxu0 0.0
        %661 = vmatpush.msra.mxu0 %v428
        %662 = vmatpush.msra.mxu0 %v427
        %663 = vmatpush.msra.mxu0 %v426
        %664 = vmatpush.msra.mxu0 %v425
        %665 = vmatpush.msra.mxu0 %v424
        %666 = vmatpush.msra.mxu0 %v423
        %667 = vmatpush.msra.mxu0 %v422
        %668 = vmatpush.msra.mxu0 %v421
        %669 = vmatmul.f32.gmra.mxu0 %v648
        %v670 = vpop.f32.mrf.mxu0
        %v671 = vadd.f32 %v552, %v670
        %672 = vmatmul.f32.gmra.mxu0 %v651
        %v673 = vpop.f32.mrf.mxu0
        %v674 = vadd.f32 %v555, %v673
        %675 = vmatmul.f32.gmra.mxu0 %v439
        %v676 = vpop.f32.mrf.mxu0
        %v677 = vadd.f32 %v558, %v676
        %678 = vmatmul.f32.gmra.mxu0 %v442
        %v679 = vpop.f32.mrf.mxu0
        %v680 = vadd.f32 %v561, %v679
        %681 = vmatmul.f32.gmra.mxu0 %v445
        %v682 = vpop.f32.mrf.mxu0
        %v683 = vadd.f32 %v564, %v682
        %684 = vmatmul.f32.gmra.mxu0 %v448
        %v685 = vpop.f32.mrf.mxu0
        %v686 = vadd.f32 %v567, %v685
        %687 = vmatmul.f32.gmra.mxu0 %v451
        %v688 = vpop.f32.mrf.mxu0
        %v689 = vadd.f32 %v570, %v688
        %690 = vmatmul.f32.gmra.mxu0 %v454
        %v691 = vpop.f32.mrf.mxu0
        %v692 = vadd.f32 %v573, %v691
        %693 = vmatmul.f32.gmra.mxu0 %v457
        %v694 = vpop.f32.mrf.mxu0
        %v695 = vadd.f32 %v576, %v694
        %696 = vmatmul.f32.gmra.mxu0 %v460
        %v697 = vpop.f32.mrf.mxu0
        %v698 = vadd.f32 %v579, %v697
        %699 = vmatmul.f32.gmra.mxu0 %v463
        %v700 = vpop.f32.mrf.mxu0
        %v701 = vadd.f32 %v582, %v700
        %702 = vmatmul.f32.gmra.mxu0 %v466
        %v703 = vpop.f32.mrf.mxu0
        %v704 = vadd.f32 %v585, %v703
        %705 = vmatmul.f32.gmra.mxu0 %v469
        %v706 = vpop.f32.mrf.mxu0
        %v707 = vadd.f32 %v588, %v706
        %708 = vmatmul.f32.gmra.mxu0 %v472
        %v709 = vpop.f32.mrf.mxu0
        %v710 = vadd.f32 %v591, %v709
        %711 = vmatmul.f32.gmra.mxu0 %v475
        %v712 = vpop.f32.mrf.mxu0
        %v713 = vadd.f32 %v594, %v712
        %714 = vmatmul.f32.gmra.mxu0 %v478
        %v715 = vpop.f32.mrf.mxu0
        %v716 = vadd.f32 %v597, %v715
        %717 = vmatmul.f32.gmra.mxu0 %v481
        %v718 = vpop.f32.mrf.mxu0
        %v719 = vadd.f32 %v600, %v718
        %720 = vmatmul.f32.gmra.mxu0 %v484
        %v721 = vpop.f32.mrf.mxu0
        %v722 = vadd.f32 %v603, %v721
        %723 = vmatmul.f32.gmra.mxu0 %v487
        %v724 = vpop.f32.mrf.mxu0
        %v725 = vadd.f32 %v606, %v724
        %726 = vmatmul.f32.gmra.mxu0 %v490
        %v727 = vpop.f32.mrf.mxu0
        %v728 = vadd.f32 %v609, %v727
        %729 = vmatmul.f32.gmra.mxu0 %v493
        %v730 = vpop.f32.mrf.mxu0
        %v731 = vadd.f32 %v612, %v730
        %732 = vmatmul.f32.gmra.mxu0 %v496
        %v733 = vpop.f32.mrf.mxu0
        %v734 = vadd.f32 %v615, %v733
        %735 = vmatmul.f32.gmra.mxu0 %v499
        %v736 = vpop.f32.mrf.mxu0
        %v737 = vadd.f32 %v618, %v736
        %738 = vmatmul.f32.gmra.mxu0 %v502
        %v739 = vpop.f32.mrf.mxu0
        %v740 = vadd.f32 %v621, %v739
        %741 = vmatmul.f32.gmra.mxu0 %v505
        %v742 = vpop.f32.mrf.mxu0
        %v743 = vadd.f32 %v624, %v742
        %744 = vmatmul.f32.gmra.mxu0 %v508
        %v745 = vpop.f32.mrf.mxu0
        %v746 = vadd.f32 %v627, %v745
        %747 = vmatmul.f32.gmra.mxu0 %v511
        %v748 = vpop.f32.mrf.mxu0
        %v749 = vadd.f32 %v630, %v748
        %750 = vmatmul.f32.gmra.mxu0 %v514
        %v751 = vpop.f32.mrf.mxu0
        %v752 = vadd.f32 %v633, %v751
        %753 = vmatmul.f32.gmra.mxu0 %v517
        %v754 = vpop.f32.mrf.mxu0
        %v755 = vadd.f32 %v636, %v754
        %756 = vmatmul.f32.gmra.mxu0 %v520
        %v757 = vpop.f32.mrf.mxu0
        %v758 = vadd.f32 %v639, %v757
        %759 = vmatmul.f32.gmra.mxu0 %v523
        %v760 = vpop.f32.mrf.mxu0
        %v761 = vadd.f32 %v642, %v760
        %762 = vmatmul.f32.gmra.mxu0 %v526
        %v763 = vpop.f32.mrf.mxu0
        %v764 = vadd.f32 %v645, %v763
        %765 = vdwg.mxu0
        %s766 = scalar_lea.vmem [#allocation5], 384
        %v767 = vld [vmem:[%s766] sm:$0xff]
        %v768 = vld [vmem:[%s766 + $0x8] sm:$0xff]
        %v769 = vld [vmem:[%s766 + $0x10] sm:$0xff]
        %v770 = vld [vmem:[%s766 + $0x18] sm:$0xff]
        %v771 = vld [vmem:[%s766 + $0x20] sm:$0xff]
        %v772 = vld [vmem:[%s766 + $0x28] sm:$0xff]
        %v773 = vld [vmem:[%s766 + $0x30] sm:$0xff]
        %v774 = vld [vmem:[%s766 + $0x38] sm:$0xff]
        %v776 = vsel %vm264, %v419, 0
        %v779 = vsel %vm264, %v420, 0
        %781 = vmatpush.msra.mxu0 0.0
        %782 = vmatpush.msra.mxu0 0.0
        %783 = vmatpush.msra.mxu0 0.0
        %784 = vmatpush.msra.mxu0 0.0
        %785 = vmatpush.msra.mxu0 0.0
        %786 = vmatpush.msra.mxu0 0.0
        %787 = vmatpush.msra.mxu0 0.0
        %788 = vmatpush.msra.mxu0 0.0
        %789 = vmatpush.msra.mxu0 %v774
        %790 = vmatpush.msra.mxu0 %v773
        %791 = vmatpush.msra.mxu0 %v772
        %792 = vmatpush.msra.mxu0 %v771
        %793 = vmatpush.msra.mxu0 %v770
        %794 = vmatpush.msra.mxu0 %v769
        %795 = vmatpush.msra.mxu0 %v768
        %796 = vmatpush.msra.mxu0 %v767
        %797 = vmatmul.f32.gmra.mxu0 %v445
        %v798 = vpop.f32.mrf.mxu0
        %v799 = vadd.f32 0.0, %v798
        %800 = vmatmul.f32.gmra.mxu0 %v448
        %v801 = vpop.f32.mrf.mxu0
        %v802 = vadd.f32 0.0, %v801
        %803 = vmatmul.f32.gmra.mxu0 %v451
        %v804 = vpop.f32.mrf.mxu0
        %v805 = vadd.f32 0.0, %v804
        %806 = vmatmul.f32.gmra.mxu0 %v454
        %v807 = vpop.f32.mrf.mxu0
        %v808 = vadd.f32 0.0, %v807
        %809 = vmatmul.f32.gmra.mxu0 %v457
        %v810 = vpop.f32.mrf.mxu0
        %v811 = vadd.f32 0.0, %v810
        %812 = vmatmul.f32.gmra.mxu0 %v460
        %v813 = vpop.f32.mrf.mxu0
        %v814 = vadd.f32 0.0, %v813
        %815 = vmatmul.f32.gmra.mxu0 %v463
        %v816 = vpop.f32.mrf.mxu0
        %v817 = vadd.f32 0.0, %v816
        %818 = vmatmul.f32.gmra.mxu0 %v466
        %v819 = vpop.f32.mrf.mxu0
        %v820 = vadd.f32 0.0, %v819
        %821 = vmatmul.f32.gmra.mxu0 %v469
        %v822 = vpop.f32.mrf.mxu0
        %v823 = vadd.f32 0.0, %v822
        %824 = vmatmul.f32.gmra.mxu0 %v472
        %v825 = vpop.f32.mrf.mxu0
        %v826 = vadd.f32 0.0, %v825
        %827 = vmatmul.f32.gmra.mxu0 %v475
        %v828 = vpop.f32.mrf.mxu0
        %v829 = vadd.f32 0.0, %v828
        %830 = vmatmul.f32.gmra.mxu0 %v478
        %v831 = vpop.f32.mrf.mxu0
        %v832 = vadd.f32 0.0, %v831
        %833 = vmatmul.f32.gmra.mxu0 %v481
        %v834 = vpop.f32.mrf.mxu0
        %v835 = vadd.f32 0.0, %v834
        %836 = vmatmul.f32.gmra.mxu0 %v484
        %v837 = vpop.f32.mrf.mxu0
        %v838 = vadd.f32 0.0, %v837
        %839 = vmatmul.f32.gmra.mxu0 %v487
        %v840 = vpop.f32.mrf.mxu0
        %v841 = vadd.f32 0.0, %v840
        %842 = vmatmul.f32.gmra.mxu0 %v490
        %v843 = vpop.f32.mrf.mxu0
        %v844 = vadd.f32 0.0, %v843
        %845 = vmatmul.f32.gmra.mxu0 %v493
        %v846 = vpop.f32.mrf.mxu0
        %v847 = vadd.f32 0.0, %v846
        %848 = vmatmul.f32.gmra.mxu0 %v496
        %v849 = vpop.f32.mrf.mxu0
        %v850 = vadd.f32 0.0, %v849
        %851 = vmatmul.f32.gmra.mxu0 %v499
        %v852 = vpop.f32.mrf.mxu0
        %v853 = vadd.f32 0.0, %v852
        %854 = vmatmul.f32.gmra.mxu0 %v502
        %v855 = vpop.f32.mrf.mxu0
        %v856 = vadd.f32 0.0, %v855
        %857 = vmatmul.f32.gmra.mxu0 %v505
        %v858 = vpop.f32.mrf.mxu0
        %v859 = vadd.f32 0.0, %v858
        %860 = vmatmul.f32.gmra.mxu0 %v508
        %v861 = vpop.f32.mrf.mxu0
        %v862 = vadd.f32 0.0, %v861
        %863 = vmatmul.f32.gmra.mxu0 %v511
        %v864 = vpop.f32.mrf.mxu0
        %v865 = vadd.f32 0.0, %v864
        %866 = vmatmul.f32.gmra.mxu0 %v514
        %v867 = vpop.f32.mrf.mxu0
        %v868 = vadd.f32 0.0, %v867
        %869 = vmatmul.f32.gmra.mxu0 %v517
        %v870 = vpop.f32.mrf.mxu0
        %v871 = vadd.f32 0.0, %v870
        %872 = vmatmul.f32.gmra.mxu0 %v520
        %v873 = vpop.f32.mrf.mxu0
        %v874 = vadd.f32 0.0, %v873
        %875 = vmatmul.f32.gmra.mxu0 %v523
        %v876 = vpop.f32.mrf.mxu0
        %v877 = vadd.f32 0.0, %v876
        %878 = vmatmul.f32.gmra.mxu0 %v526
        %v879 = vpop.f32.mrf.mxu0
        %v880 = vadd.f32 0.0, %v879
        %881 = vmatmul.f32.gmra.mxu0 %v529
        %v882 = vpop.f32.mrf.mxu0
        %v883 = vadd.f32 0.0, %v882
        %884 = vmatmul.f32.gmra.mxu0 %v532
        %v885 = vpop.f32.mrf.mxu0
        %v886 = vadd.f32 0.0, %v885
        %887 = vmatmul.f32.gmra.mxu0 %v776
        %v888 = vpop.f32.mrf.mxu0
        %v889 = vadd.f32 0.0, %v888
        %890 = vmatmul.f32.gmra.mxu0 %v779
        %v891 = vpop.f32.mrf.mxu0
        %v892 = vadd.f32 0.0, %v891
        %893 = vdwg.mxu0
        %v894 = vadd.f32 %v671, %v799
        %v895 = vadd.f32 %v674, %v802
        %v896 = vadd.f32 %v677, %v805
        %v897 = vadd.f32 %v680, %v808
        %v898 = vadd.f32 %v683, %v811
        %v899 = vadd.f32 %v686, %v814
        %v900 = vadd.f32 %v689, %v817
        %v901 = vadd.f32 %v692, %v820
        %v902 = vadd.f32 %v695, %v823
        %v903 = vadd.f32 %v698, %v826
        %v904 = vadd.f32 %v701, %v829
        %v905 = vadd.f32 %v704, %v832
        %v906 = vadd.f32 %v707, %v835
        %v907 = vadd.f32 %v710, %v838
        %v908 = vadd.f32 %v713, %v841
        %v909 = vadd.f32 %v716, %v844
        %v910 = vadd.f32 %v719, %v847
        %v911 = vadd.f32 %v722, %v850
        %v912 = vadd.f32 %v725, %v853
        %v913 = vadd.f32 %v728, %v856
        %v914 = vadd.f32 %v731, %v859
        %v915 = vadd.f32 %v734, %v862
        %v916 = vadd.f32 %v737, %v865
        %v917 = vadd.f32 %v740, %v868
        %v918 = vadd.f32 %v743, %v871
        %v919 = vadd.f32 %v746, %v874
        %v920 = vadd.f32 %v749, %v877
        %v921 = vadd.f32 %v752, %v880
        %v922 = vadd.f32 %v755, %v883
        %v923 = vadd.f32 %v758, %v886
        %v924 = vadd.f32 %v761, %v889
        %v925 = vadd.f32 %v764, %v892
        %v926 = vld [vmem:[#allocation2 + $0x1] sm:$0xff]
        %v927 = vld [vmem:[#allocation2 + $0x9] sm:$0xff]
        %v928 = vld [vmem:[#allocation2 + $0x19] sm:$0xff]
        %v929 = vld [vmem:[#allocation2 + $0x21] sm:$0xff]
        %v930 = vld [vmem:[#allocation2 + $0x31] sm:$0xff]
        %v931 = vld [vmem:[#allocation2 + $0x39] sm:$0xff]
        %v932 = vld [vmem:[#allocation2 + $0x49] sm:$0xff]
        %v933 = vld [vmem:[#allocation2 + $0x51] sm:$0xff]
        %v934 = vld [vmem:[#allocation2 + $0x61] sm:$0xff]
        %v935 = vld [vmem:[#allocation2 + $0x69] sm:$0xff]
        %v936 = vld [vmem:[#allocation2 + $0x79] sm:$0xff]
        %v937 = vld [vmem:[#allocation2 + $0x81] sm:$0xff]
        %v938 = vld [vmem:[#allocation2 + $0x91] sm:$0xff]
        %v939 = vld [vmem:[#allocation2 + $0x99] sm:$0xff]
        %v940 = vld [vmem:[#allocation2 + $0xa9] sm:$0xff]
        %v941 = vld [vmem:[#allocation2 + $0xb1] sm:$0xff]
        %v942 = vld [vmem:[#allocation2 + $0xc1] sm:$0xff]
        %v943 = vld [vmem:[#allocation2 + $0xc9] sm:$0xff]
        %v944 = vld [vmem:[#allocation2 + $0xd9] sm:$0xff]
        %v945 = vld [vmem:[#allocation2 + $0xe1] sm:$0xff]
        %v946 = vld [vmem:[#allocation2 + $0xf1] sm:$0xff]
        %v947 = vld [vmem:[#allocation2 + $0xf9] sm:$0xff]
        %v948 = vld [vmem:[#allocation2 + $0x109] sm:$0xff]
        %v949 = vld [vmem:[#allocation2 + $0x111] sm:$0xff]
        %v950 = vld [vmem:[#allocation2 + $0x121] sm:$0xff]
        %v951 = vld [vmem:[#allocation2 + $0x129] sm:$0xff]
        %v952 = vld [vmem:[#allocation2 + $0x139] sm:$0xff]
        %v953 = vld [vmem:[#allocation2 + $0x141] sm:$0xff]
        %v954 = vld [vmem:[#allocation2 + $0x151] sm:$0xff]
        %v955 = vld [vmem:[#allocation2 + $0x159] sm:$0xff]
        %v956 = vld [vmem:[#allocation2 + $0x169] sm:$0xff]
        %v957 = vld [vmem:[#allocation2 + $0x171] sm:$0xff]
        %v958 = vld [vmem:[#allocation2 + $0x181] sm:$0xff]
        %v959 = vld [vmem:[#allocation2 + $0x189] sm:$0xff]
        %v960 = vld [vmem:[#allocation2 + $0x199] sm:$0xff]
        %v961 = vld [vmem:[#allocation2 + $0x1a1] sm:$0xff]
        %s962 = scalar_lea.vmem [#allocation5], 64
        %v963 = vld [vmem:[%s962] sm:$0xff]
        %v964 = vld [vmem:[%s962 + $0x8] sm:$0xff]
        %v965 = vld [vmem:[%s962 + $0x10] sm:$0xff]
        %v966 = vld [vmem:[%s962 + $0x18] sm:$0xff]
        %v967 = vld [vmem:[%s962 + $0x20] sm:$0xff]
        %v968 = vld [vmem:[%s962 + $0x28] sm:$0xff]
        %v969 = vld [vmem:[%s962 + $0x30] sm:$0xff]
        %v970 = vld [vmem:[%s962 + $0x38] sm:$0xff]
        %v972 = vsel %vm264, %v926, 0
        %v975 = vsel %vm264, %v927, 0
        %v978 = vsel %vm264, %v928, 0
        %v981 = vsel %vm264, %v929, 0
        %v984 = vsel %vm264, %v930, 0
        %v987 = vsel %vm264, %v931, 0
        %v990 = vsel %vm264, %v932, 0
        %v993 = vsel %vm264, %v933, 0
        %v996 = vsel %vm264, %v934, 0
        %v999 = vsel %vm264, %v935, 0
        %v1002 = vsel %vm264, %v936, 0
        %v1005 = vsel %vm264, %v937, 0
        %v1008 = vsel %vm264, %v938, 0
        %v1011 = vsel %vm264, %v939, 0
        %v1014 = vsel %vm264, %v940, 0
        %v1017 = vsel %vm264, %v941, 0
        %v1020 = vsel %vm264, %v942, 0
        %v1023 = vsel %vm264, %v943, 0
        %v1026 = vsel %vm264, %v944, 0
        %v1029 = vsel %vm264, %v945, 0
        %v1032 = vsel %vm264, %v946, 0
        %v1035 = vsel %vm264, %v947, 0
        %v1038 = vsel %vm264, %v948, 0
        %v1041 = vsel %vm264, %v949, 0
        %v1044 = vsel %vm264, %v950, 0
        %v1047 = vsel %vm264, %v951, 0
        %v1050 = vsel %vm264, %v952, 0
        %v1053 = vsel %vm264, %v953, 0
        %v1056 = vsel %vm264, %v954, 0
        %v1059 = vsel %vm264, %v955, 0
        %v1062 = vsel %vm264, %v956, 0
        %v1065 = vsel %vm264, %v957, 0
        %1067 = vmatpush.msra.mxu0 0.0
        %1068 = vmatpush.msra.mxu0 0.0
        %1069 = vmatpush.msra.mxu0 0.0
        %1070 = vmatpush.msra.mxu0 0.0
        %1071 = vmatpush.msra.mxu0 0.0
        %1072 = vmatpush.msra.mxu0 0.0
        %1073 = vmatpush.msra.mxu0 0.0
        %1074 = vmatpush.msra.mxu0 0.0
        %1075 = vmatpush.msra.mxu0 %v970
        %1076 = vmatpush.msra.mxu0 %v969
        %1077 = vmatpush.msra.mxu0 %v968
        %1078 = vmatpush.msra.mxu0 %v967
        %1079 = vmatpush.msra.mxu0 %v966
        %1080 = vmatpush.msra.mxu0 %v965
        %1081 = vmatpush.msra.mxu0 %v964
        %1082 = vmatpush.msra.mxu0 %v963
        %1083 = vmatmul.f32.gmra.mxu0 %v972
        %v1084 = vpop.f32.mrf.mxu0
        %v1085 = vadd.f32 0.0, %v1084
        %1086 = vmatmul.f32.gmra.mxu0 %v975
        %v1087 = vpop.f32.mrf.mxu0
        %v1088 = vadd.f32 0.0, %v1087
        %1089 = vmatmul.f32.gmra.mxu0 %v978
        %v1090 = vpop.f32.mrf.mxu0
        %v1091 = vadd.f32 0.0, %v1090
        %1092 = vmatmul.f32.gmra.mxu0 %v981
        %v1093 = vpop.f32.mrf.mxu0
        %v1094 = vadd.f32 0.0, %v1093
        %1095 = vmatmul.f32.gmra.mxu0 %v984
        %v1096 = vpop.f32.mrf.mxu0
        %v1097 = vadd.f32 0.0, %v1096
        %1098 = vmatmul.f32.gmra.mxu0 %v987
        %v1099 = vpop.f32.mrf.mxu0
        %v1100 = vadd.f32 0.0, %v1099
        %1101 = vmatmul.f32.gmra.mxu0 %v990
        %v1102 = vpop.f32.mrf.mxu0
        %v1103 = vadd.f32 0.0, %v1102
        %1104 = vmatmul.f32.gmra.mxu0 %v993
        %v1105 = vpop.f32.mrf.mxu0
        %v1106 = vadd.f32 0.0, %v1105
        %1107 = vmatmul.f32.gmra.mxu0 %v996
        %v1108 = vpop.f32.mrf.mxu0
        %v1109 = vadd.f32 0.0, %v1108
        %1110 = vmatmul.f32.gmra.mxu0 %v999
        %v1111 = vpop.f32.mrf.mxu0
        %v1112 = vadd.f32 0.0, %v1111
        %1113 = vmatmul.f32.gmra.mxu0 %v1002
        %v1114 = vpop.f32.mrf.mxu0
        %v1115 = vadd.f32 0.0, %v1114
        %1116 = vmatmul.f32.gmra.mxu0 %v1005
        %v1117 = vpop.f32.mrf.mxu0
        %v1118 = vadd.f32 0.0, %v1117
        %1119 = vmatmul.f32.gmra.mxu0 %v1008
        %v1120 = vpop.f32.mrf.mxu0
        %v1121 = vadd.f32 0.0, %v1120
        %1122 = vmatmul.f32.gmra.mxu0 %v1011
        %v1123 = vpop.f32.mrf.mxu0
        %v1124 = vadd.f32 0.0, %v1123
        %1125 = vmatmul.f32.gmra.mxu0 %v1014
        %v1126 = vpop.f32.mrf.mxu0
        %v1127 = vadd.f32 0.0, %v1126
        %1128 = vmatmul.f32.gmra.mxu0 %v1017
        %v1129 = vpop.f32.mrf.mxu0
        %v1130 = vadd.f32 0.0, %v1129
        %1131 = vmatmul.f32.gmra.mxu0 %v1020
        %v1132 = vpop.f32.mrf.mxu0
        %v1133 = vadd.f32 0.0, %v1132
        %1134 = vmatmul.f32.gmra.mxu0 %v1023
        %v1135 = vpop.f32.mrf.mxu0
        %v1136 = vadd.f32 0.0, %v1135
        %1137 = vmatmul.f32.gmra.mxu0 %v1026
        %v1138 = vpop.f32.mrf.mxu0
        %v1139 = vadd.f32 0.0, %v1138
        %1140 = vmatmul.f32.gmra.mxu0 %v1029
        %v1141 = vpop.f32.mrf.mxu0
        %v1142 = vadd.f32 0.0, %v1141
        %1143 = vmatmul.f32.gmra.mxu0 %v1032
        %v1144 = vpop.f32.mrf.mxu0
        %v1145 = vadd.f32 0.0, %v1144
        %1146 = vmatmul.f32.gmra.mxu0 %v1035
        %v1147 = vpop.f32.mrf.mxu0
        %v1148 = vadd.f32 0.0, %v1147
        %1149 = vmatmul.f32.gmra.mxu0 %v1038
        %v1150 = vpop.f32.mrf.mxu0
        %v1151 = vadd.f32 0.0, %v1150
        %1152 = vmatmul.f32.gmra.mxu0 %v1041
        %v1153 = vpop.f32.mrf.mxu0
        %v1154 = vadd.f32 0.0, %v1153
        %1155 = vmatmul.f32.gmra.mxu0 %v1044
        %v1156 = vpop.f32.mrf.mxu0
        %v1157 = vadd.f32 0.0, %v1156
        %1158 = vmatmul.f32.gmra.mxu0 %v1047
        %v1159 = vpop.f32.mrf.mxu0
        %v1160 = vadd.f32 0.0, %v1159
        %1161 = vmatmul.f32.gmra.mxu0 %v1050
        %v1162 = vpop.f32.mrf.mxu0
        %v1163 = vadd.f32 0.0, %v1162
        %1164 = vmatmul.f32.gmra.mxu0 %v1053
        %v1165 = vpop.f32.mrf.mxu0
        %v1166 = vadd.f32 0.0, %v1165
        %1167 = vmatmul.f32.gmra.mxu0 %v1056
        %v1168 = vpop.f32.mrf.mxu0
        %v1169 = vadd.f32 0.0, %v1168
        %1170 = vmatmul.f32.gmra.mxu0 %v1059
        %v1171 = vpop.f32.mrf.mxu0
        %v1172 = vadd.f32 0.0, %v1171
        %1173 = vmatmul.f32.gmra.mxu0 %v1062
        %v1174 = vpop.f32.mrf.mxu0
        %v1175 = vadd.f32 0.0, %v1174
        %1176 = vmatmul.f32.gmra.mxu0 %v1065
        %v1177 = vpop.f32.mrf.mxu0
        %v1178 = vadd.f32 0.0, %v1177
        %1179 = vdwg.mxu0
        %v1180 = vadd.f32 %v894, %v1085
        %v1181 = vadd.f32 %v895, %v1088
        %v1182 = vadd.f32 %v896, %v1091
        %v1183 = vadd.f32 %v897, %v1094
        %v1184 = vadd.f32 %v898, %v1097
        %v1185 = vadd.f32 %v899, %v1100
        %v1186 = vadd.f32 %v900, %v1103
        %v1187 = vadd.f32 %v901, %v1106
        %v1188 = vadd.f32 %v902, %v1109
        %v1189 = vadd.f32 %v903, %v1112
        %v1190 = vadd.f32 %v904, %v1115
        %v1191 = vadd.f32 %v905, %v1118
        %v1192 = vadd.f32 %v906, %v1121
        %v1193 = vadd.f32 %v907, %v1124
        %v1194 = vadd.f32 %v908, %v1127
        %v1195 = vadd.f32 %v909, %v1130
        %v1196 = vadd.f32 %v910, %v1133
        %v1197 = vadd.f32 %v911, %v1136
        %v1198 = vadd.f32 %v912, %v1139
        %v1199 = vadd.f32 %v913, %v1142
        %v1200 = vadd.f32 %v914, %v1145
        %v1201 = vadd.f32 %v915, %v1148
        %v1202 = vadd.f32 %v916, %v1151
        %v1203 = vadd.f32 %v917, %v1154
        %v1204 = vadd.f32 %v918, %v1157
        %v1205 = vadd.f32 %v919, %v1160
        %v1206 = vadd.f32 %v920, %v1163
        %v1207 = vadd.f32 %v921, %v1166
        %v1208 = vadd.f32 %v922, %v1169
        %v1209 = vadd.f32 %v923, %v1172
        %v1210 = vadd.f32 %v924, %v1175
        %v1211 = vadd.f32 %v925, %v1178
        %s1212 = scalar_lea.vmem [#allocation5], 256
        %v1213 = vld [vmem:[%s1212] sm:$0xff]
        %v1214 = vld [vmem:[%s1212 + $0x8] sm:$0xff]
        %v1215 = vld [vmem:[%s1212 + $0x10] sm:$0xff]
        %v1216 = vld [vmem:[%s1212 + $0x18] sm:$0xff]
        %v1217 = vld [vmem:[%s1212 + $0x20] sm:$0xff]
        %v1218 = vld [vmem:[%s1212 + $0x28] sm:$0xff]
        %v1219 = vld [vmem:[%s1212 + $0x30] sm:$0xff]
        %v1220 = vld [vmem:[%s1212 + $0x38] sm:$0xff]
        %v1222 = vsel %vm264, %v958, 0
        %v1225 = vsel %vm264, %v959, 0
        %1227 = vmatpush.msra.mxu0 0.0
        %1228 = vmatpush.msra.mxu0 0.0
        %1229 = vmatpush.msra.mxu0 0.0
        %1230 = vmatpush.msra.mxu0 0.0
        %1231 = vmatpush.msra.mxu0 0.0
        %1232 = vmatpush.msra.mxu0 0.0
        %1233 = vmatpush.msra.mxu0 0.0
        %1234 = vmatpush.msra.mxu0 0.0
        %1235 = vmatpush.msra.mxu0 %v1220
        %1236 = vmatpush.msra.mxu0 %v1219
        %1237 = vmatpush.msra.mxu0 %v1218
        %1238 = vmatpush.msra.mxu0 %v1217
        %1239 = vmatpush.msra.mxu0 %v1216
        %1240 = vmatpush.msra.mxu0 %v1215
        %1241 = vmatpush.msra.mxu0 %v1214
        %1242 = vmatpush.msra.mxu0 %v1213
        %1243 = vmatmul.f32.gmra.mxu0 %v978
        %v1244 = vpop.f32.mrf.mxu0
        %v1245 = vadd.f32 0.0, %v1244
        %1246 = vmatmul.f32.gmra.mxu0 %v981
        %v1247 = vpop.f32.mrf.mxu0
        %v1248 = vadd.f32 0.0, %v1247
        %1249 = vmatmul.f32.gmra.mxu0 %v984
        %v1250 = vpop.f32.mrf.mxu0
        %v1251 = vadd.f32 0.0, %v1250
        %1252 = vmatmul.f32.gmra.mxu0 %v987
        %v1253 = vpop.f32.mrf.mxu0
        %v1254 = vadd.f32 0.0, %v1253
        %1255 = vmatmul.f32.gmra.mxu0 %v990
        %v1256 = vpop.f32.mrf.mxu0
        %v1257 = vadd.f32 0.0, %v1256
        %1258 = vmatmul.f32.gmra.mxu0 %v993
        %v1259 = vpop.f32.mrf.mxu0
        %v1260 = vadd.f32 0.0, %v1259
        %1261 = vmatmul.f32.gmra.mxu0 %v996
        %v1262 = vpop.f32.mrf.mxu0
        %v1263 = vadd.f32 0.0, %v1262
        %1264 = vmatmul.f32.gmra.mxu0 %v999
        %v1265 = vpop.f32.mrf.mxu0
        %v1266 = vadd.f32 0.0, %v1265
        %1267 = vmatmul.f32.gmra.mxu0 %v1002
        %v1268 = vpop.f32.mrf.mxu0
        %v1269 = vadd.f32 0.0, %v1268
        %1270 = vmatmul.f32.gmra.mxu0 %v1005
        %v1271 = vpop.f32.mrf.mxu0
        %v1272 = vadd.f32 0.0, %v1271
        %1273 = vmatmul.f32.gmra.mxu0 %v1008
        %v1274 = vpop.f32.mrf.mxu0
        %v1275 = vadd.f32 0.0, %v1274
        %1276 = vmatmul.f32.gmra.mxu0 %v1011
        %v1277 = vpop.f32.mrf.mxu0
        %v1278 = vadd.f32 0.0, %v1277
        %1279 = vmatmul.f32.gmra.mxu0 %v1014
        %v1280 = vpop.f32.mrf.mxu0
        %v1281 = vadd.f32 0.0, %v1280
        %1282 = vmatmul.f32.gmra.mxu0 %v1017
        %v1283 = vpop.f32.mrf.mxu0
        %v1284 = vadd.f32 0.0, %v1283
        %1285 = vmatmul.f32.gmra.mxu0 %v1020
        %v1286 = vpop.f32.mrf.mxu0
        %v1287 = vadd.f32 0.0, %v1286
        %1288 = vmatmul.f32.gmra.mxu0 %v1023
        %v1289 = vpop.f32.mrf.mxu0
        %v1290 = vadd.f32 0.0, %v1289
        %1291 = vmatmul.f32.gmra.mxu0 %v1026
        %v1292 = vpop.f32.mrf.mxu0
        %v1293 = vadd.f32 0.0, %v1292
        %1294 = vmatmul.f32.gmra.mxu0 %v1029
        %v1295 = vpop.f32.mrf.mxu0
        %v1296 = vadd.f32 0.0, %v1295
        %1297 = vmatmul.f32.gmra.mxu0 %v1032
        %v1298 = vpop.f32.mrf.mxu0
        %v1299 = vadd.f32 0.0, %v1298
        %1300 = vmatmul.f32.gmra.mxu0 %v1035
        %v1301 = vpop.f32.mrf.mxu0
        %v1302 = vadd.f32 0.0, %v1301
        %1303 = vmatmul.f32.gmra.mxu0 %v1038
        %v1304 = vpop.f32.mrf.mxu0
        %v1305 = vadd.f32 0.0, %v1304
        %1306 = vmatmul.f32.gmra.mxu0 %v1041
        %v1307 = vpop.f32.mrf.mxu0
        %v1308 = vadd.f32 0.0, %v1307
        %1309 = vmatmul.f32.gmra.mxu0 %v1044
        %v1310 = vpop.f32.mrf.mxu0
        %v1311 = vadd.f32 0.0, %v1310
        %1312 = vmatmul.f32.gmra.mxu0 %v1047
        %v1313 = vpop.f32.mrf.mxu0
        %v1314 = vadd.f32 0.0, %v1313
        %1315 = vmatmul.f32.gmra.mxu0 %v1050
        %v1316 = vpop.f32.mrf.mxu0
        %v1317 = vadd.f32 0.0, %v1316
        %1318 = vmatmul.f32.gmra.mxu0 %v1053
        %v1319 = vpop.f32.mrf.mxu0
        %v1320 = vadd.f32 0.0, %v1319
        %1321 = vmatmul.f32.gmra.mxu0 %v1056
        %v1322 = vpop.f32.mrf.mxu0
        %v1323 = vadd.f32 0.0, %v1322
        %1324 = vmatmul.f32.gmra.mxu0 %v1059
        %v1325 = vpop.f32.mrf.mxu0
        %v1326 = vadd.f32 0.0, %v1325
        %1327 = vmatmul.f32.gmra.mxu0 %v1062
        %v1328 = vpop.f32.mrf.mxu0
        %v1329 = vadd.f32 0.0, %v1328
        %1330 = vmatmul.f32.gmra.mxu0 %v1065
        %v1331 = vpop.f32.mrf.mxu0
        %v1332 = vadd.f32 0.0, %v1331
        %1333 = vmatmul.f32.gmra.mxu0 %v1222
        %v1334 = vpop.f32.mrf.mxu0
        %v1335 = vadd.f32 0.0, %v1334
        %1336 = vmatmul.f32.gmra.mxu0 %v1225
        %v1337 = vpop.f32.mrf.mxu0
        %v1338 = vadd.f32 0.0, %v1337
        %1339 = vdwg.mxu0
        %v1340 = vadd.f32 %v1180, %v1245
        %v1341 = vadd.f32 %v1181, %v1248
        %v1342 = vadd.f32 %v1182, %v1251
        %v1343 = vadd.f32 %v1183, %v1254
        %v1344 = vadd.f32 %v1184, %v1257
        %v1345 = vadd.f32 %v1185, %v1260
        %v1346 = vadd.f32 %v1186, %v1263
        %v1347 = vadd.f32 %v1187, %v1266
        %v1348 = vadd.f32 %v1188, %v1269
        %v1349 = vadd.f32 %v1189, %v1272
        %v1350 = vadd.f32 %v1190, %v1275
        %v1351 = vadd.f32 %v1191, %v1278
        %v1352 = vadd.f32 %v1192, %v1281
        %v1353 = vadd.f32 %v1193, %v1284
        %v1354 = vadd.f32 %v1194, %v1287
        %v1355 = vadd.f32 %v1195, %v1290
        %v1356 = vadd.f32 %v1196, %v1293
        %v1357 = vadd.f32 %v1197, %v1296
        %v1358 = vadd.f32 %v1198, %v1299
        %v1359 = vadd.f32 %v1199, %v1302
        %v1360 = vadd.f32 %v1200, %v1305
        %v1361 = vadd.f32 %v1201, %v1308
        %v1362 = vadd.f32 %v1202, %v1311
        %v1363 = vadd.f32 %v1203, %v1314
        %v1364 = vadd.f32 %v1204, %v1317
        %v1365 = vadd.f32 %v1205, %v1320
        %v1366 = vadd.f32 %v1206, %v1323
        %v1367 = vadd.f32 %v1207, %v1326
        %v1368 = vadd.f32 %v1208, %v1329
        %v1369 = vadd.f32 %v1209, %v1332
        %v1370 = vadd.f32 %v1210, %v1335
        %v1371 = vadd.f32 %v1211, %v1338
        %s1372 = scalar_lea.vmem [#allocation5], 448
        %v1373 = vld [vmem:[%s1372] sm:$0xff]
        %v1374 = vld [vmem:[%s1372 + $0x8] sm:$0xff]
        %v1375 = vld [vmem:[%s1372 + $0x10] sm:$0xff]
        %v1376 = vld [vmem:[%s1372 + $0x18] sm:$0xff]
        %v1377 = vld [vmem:[%s1372 + $0x20] sm:$0xff]
        %v1378 = vld [vmem:[%s1372 + $0x28] sm:$0xff]
        %v1379 = vld [vmem:[%s1372 + $0x30] sm:$0xff]
        %v1380 = vld [vmem:[%s1372 + $0x38] sm:$0xff]
        %v1382 = vsel %vm264, %v960, 0
        %v1385 = vsel %vm264, %v961, 0
        %1387 = vmatpush.msra.mxu0 0.0
        %1388 = vmatpush.msra.mxu0 0.0
        %1389 = vmatpush.msra.mxu0 0.0
        %1390 = vmatpush.msra.mxu0 0.0
        %1391 = vmatpush.msra.mxu0 0.0
        %1392 = vmatpush.msra.mxu0 0.0
        %1393 = vmatpush.msra.mxu0 0.0
        %1394 = vmatpush.msra.mxu0 0.0
        %1395 = vmatpush.msra.mxu0 %v1380
        %1396 = vmatpush.msra.mxu0 %v1379
        %1397 = vmatpush.msra.mxu0 %v1378
        %1398 = vmatpush.msra.mxu0 %v1377
        %1399 = vmatpush.msra.mxu0 %v1376
        %1400 = vmatpush.msra.mxu0 %v1375
        %1401 = vmatpush.msra.mxu0 %v1374
        %1402 = vmatpush.msra.mxu0 %v1373
        %1403 = vmatmul.f32.gmra.mxu0 %v984
        %v1404 = vpop.f32.mrf.mxu0
        %v1405 = vadd.f32 0.0, %v1404
        %1406 = vmatmul.f32.gmra.mxu0 %v987
        %v1407 = vpop.f32.mrf.mxu0
        %v1408 = vadd.f32 0.0, %v1407
        %1409 = vmatmul.f32.gmra.mxu0 %v990
        %v1410 = vpop.f32.mrf.mxu0
        %v1411 = vadd.f32 0.0, %v1410
        %1412 = vmatmul.f32.gmra.mxu0 %v993
        %v1413 = vpop.f32.mrf.mxu0
        %v1414 = vadd.f32 0.0, %v1413
        %1415 = vmatmul.f32.gmra.mxu0 %v996
        %v1416 = vpop.f32.mrf.mxu0
        %v1417 = vadd.f32 0.0, %v1416
        %1418 = vmatmul.f32.gmra.mxu0 %v999
        %v1419 = vpop.f32.mrf.mxu0
        %v1420 = vadd.f32 0.0, %v1419
        %1421 = vmatmul.f32.gmra.mxu0 %v1002
        %v1422 = vpop.f32.mrf.mxu0
        %v1423 = vadd.f32 0.0, %v1422
        %1424 = vmatmul.f32.gmra.mxu0 %v1005
        %v1425 = vpop.f32.mrf.mxu0
        %v1426 = vadd.f32 0.0, %v1425
        %1427 = vmatmul.f32.gmra.mxu0 %v1008
        %v1428 = vpop.f32.mrf.mxu0
        %v1429 = vadd.f32 0.0, %v1428
        %1430 = vmatmul.f32.gmra.mxu0 %v1011
        %v1431 = vpop.f32.mrf.mxu0
        %v1432 = vadd.f32 0.0, %v1431
        %1433 = vmatmul.f32.gmra.mxu0 %v1014
        %v1434 = vpop.f32.mrf.mxu0
        %v1435 = vadd.f32 0.0, %v1434
        %1436 = vmatmul.f32.gmra.mxu0 %v1017
        %v1437 = vpop.f32.mrf.mxu0
        %v1438 = vadd.f32 0.0, %v1437
        %1439 = vmatmul.f32.gmra.mxu0 %v1020
        %v1440 = vpop.f32.mrf.mxu0
        %v1441 = vadd.f32 0.0, %v1440
        %1442 = vmatmul.f32.gmra.mxu0 %v1023
        %v1443 = vpop.f32.mrf.mxu0
        %v1444 = vadd.f32 0.0, %v1443
        %1445 = vmatmul.f32.gmra.mxu0 %v1026
        %v1446 = vpop.f32.mrf.mxu0
        %v1447 = vadd.f32 0.0, %v1446
        %1448 = vmatmul.f32.gmra.mxu0 %v1029
        %v1449 = vpop.f32.mrf.mxu0
        %v1450 = vadd.f32 0.0, %v1449
        %1451 = vmatmul.f32.gmra.mxu0 %v1032
        %v1452 = vpop.f32.mrf.mxu0
        %v1453 = vadd.f32 0.0, %v1452
        %1454 = vmatmul.f32.gmra.mxu0 %v1035
        %v1455 = vpop.f32.mrf.mxu0
        %v1456 = vadd.f32 0.0, %v1455
        %1457 = vmatmul.f32.gmra.mxu0 %v1038
        %v1458 = vpop.f32.mrf.mxu0
        %v1459 = vadd.f32 0.0, %v1458
        %1460 = vmatmul.f32.gmra.mxu0 %v1041
        %v1461 = vpop.f32.mrf.mxu0
        %v1462 = vadd.f32 0.0, %v1461
        %1463 = vmatmul.f32.gmra.mxu0 %v1044
        %v1464 = vpop.f32.mrf.mxu0
        %v1465 = vadd.f32 0.0, %v1464
        %1466 = vmatmul.f32.gmra.mxu0 %v1047
        %v1467 = vpop.f32.mrf.mxu0
        %v1468 = vadd.f32 0.0, %v1467
        %1469 = vmatmul.f32.gmra.mxu0 %v1050
        %v1470 = vpop.f32.mrf.mxu0
        %v1471 = vadd.f32 0.0, %v1470
        %1472 = vmatmul.f32.gmra.mxu0 %v1053
        %v1473 = vpop.f32.mrf.mxu0
        %v1474 = vadd.f32 0.0, %v1473
        %1475 = vmatmul.f32.gmra.mxu0 %v1056
        %v1476 = vpop.f32.mrf.mxu0
        %v1477 = vadd.f32 0.0, %v1476
        %1478 = vmatmul.f32.gmra.mxu0 %v1059
        %v1479 = vpop.f32.mrf.mxu0
        %v1480 = vadd.f32 0.0, %v1479
        %1481 = vmatmul.f32.gmra.mxu0 %v1062
        %v1482 = vpop.f32.mrf.mxu0
        %v1483 = vadd.f32 0.0, %v1482
        %1484 = vmatmul.f32.gmra.mxu0 %v1065
        %v1485 = vpop.f32.mrf.mxu0
        %v1486 = vadd.f32 0.0, %v1485
        %1487 = vmatmul.f32.gmra.mxu0 %v1222
        %v1488 = vpop.f32.mrf.mxu0
        %v1489 = vadd.f32 0.0, %v1488
        %1490 = vmatmul.f32.gmra.mxu0 %v1225
        %v1491 = vpop.f32.mrf.mxu0
        %v1492 = vadd.f32 0.0, %v1491
        %1493 = vmatmul.f32.gmra.mxu0 %v1382
        %v1494 = vpop.f32.mrf.mxu0
        %v1495 = vadd.f32 0.0, %v1494
        %1496 = vmatmul.f32.gmra.mxu0 %v1385
        %v1497 = vpop.f32.mrf.mxu0
        %v1498 = vadd.f32 0.0, %v1497
        %1499 = vdwg.mxu0
        %v1500 = vadd.f32 %v1340, %v1405
        %v1501 = vadd.f32 %v1341, %v1408
        %v1502 = vadd.f32 %v1342, %v1411
        %v1503 = vadd.f32 %v1343, %v1414
        %v1504 = vadd.f32 %v1344, %v1417
        %v1505 = vadd.f32 %v1345, %v1420
        %v1506 = vadd.f32 %v1346, %v1423
        %v1507 = vadd.f32 %v1347, %v1426
        %v1508 = vadd.f32 %v1348, %v1429
        %v1509 = vadd.f32 %v1349, %v1432
        %v1510 = vadd.f32 %v1350, %v1435
        %v1511 = vadd.f32 %v1351, %v1438
        %v1512 = vadd.f32 %v1352, %v1441
        %v1513 = vadd.f32 %v1353, %v1444
        %v1514 = vadd.f32 %v1354, %v1447
        %v1515 = vadd.f32 %v1355, %v1450
        %v1516 = vadd.f32 %v1356, %v1453
        %v1517 = vadd.f32 %v1357, %v1456
        %v1518 = vadd.f32 %v1358, %v1459
        %v1519 = vadd.f32 %v1359, %v1462
        %v1520 = vadd.f32 %v1360, %v1465
        %v1521 = vadd.f32 %v1361, %v1468
        %v1522 = vadd.f32 %v1362, %v1471
        %v1523 = vadd.f32 %v1363, %v1474
        %v1524 = vadd.f32 %v1364, %v1477
        %v1525 = vadd.f32 %v1365, %v1480
        %v1526 = vadd.f32 %v1366, %v1483
        %v1527 = vadd.f32 %v1367, %v1486
        %v1528 = vadd.f32 %v1368, %v1489
        %v1529 = vadd.f32 %v1369, %v1492
        %v1530 = vadd.f32 %v1370, %v1495
        %v1531 = vadd.f32 %v1371, %v1498
        %v1532 = vld [vmem:[#allocation2 + $0x2] sm:$0xff]
        %v1533 = vld [vmem:[#allocation2 + $0xa] sm:$0xff]
        %v1534 = vld [vmem:[#allocation2 + $0x1a] sm:$0xff]
        %v1535 = vld [vmem:[#allocation2 + $0x22] sm:$0xff]
        %v1536 = vld [vmem:[#allocation2 + $0x32] sm:$0xff]
        %v1537 = vld [vmem:[#allocation2 + $0x3a] sm:$0xff]
        %v1538 = vld [vmem:[#allocation2 + $0x4a] sm:$0xff]
        %v1539 = vld [vmem:[#allocation2 + $0x52] sm:$0xff]
        %v1540 = vld [vmem:[#allocation2 + $0x62] sm:$0xff]
        %v1541 = vld [vmem:[#allocation2 + $0x6a] sm:$0xff]
        %v1542 = vld [vmem:[#allocation2 + $0x7a] sm:$0xff]
        %v1543 = vld [vmem:[#allocation2 + $0x82] sm:$0xff]
        %v1544 = vld [vmem:[#allocation2 + $0x92] sm:$0xff]
        %v1545 = vld [vmem:[#allocation2 + $0x9a] sm:$0xff]
        %v1546 = vld [vmem:[#allocation2 + $0xaa] sm:$0xff]
        %v1547 = vld [vmem:[#allocation2 + $0xb2] sm:$0xff]
        %v1548 = vld [vmem:[#allocation2 + $0xc2] sm:$0xff]
        %v1549 = vld [vmem:[#allocation2 + $0xca] sm:$0xff]
        %v1550 = vld [vmem:[#allocation2 + $0xda] sm:$0xff]
        %v1551 = vld [vmem:[#allocation2 + $0xe2] sm:$0xff]
        %v1552 = vld [vmem:[#allocation2 + $0xf2] sm:$0xff]
        %v1553 = vld [vmem:[#allocation2 + $0xfa] sm:$0xff]
        %v1554 = vld [vmem:[#allocation2 + $0x10a] sm:$0xff]
        %v1555 = vld [vmem:[#allocation2 + $0x112] sm:$0xff]
        %v1556 = vld [vmem:[#allocation2 + $0x122] sm:$0xff]
        %v1557 = vld [vmem:[#allocation2 + $0x12a] sm:$0xff]
        %v1558 = vld [vmem:[#allocation2 + $0x13a] sm:$0xff]
        %v1559 = vld [vmem:[#allocation2 + $0x142] sm:$0xff]
        %v1560 = vld [vmem:[#allocation2 + $0x152] sm:$0xff]
        %v1561 = vld [vmem:[#allocation2 + $0x15a] sm:$0xff]
        %v1562 = vld [vmem:[#allocation2 + $0x16a] sm:$0xff]
        %v1563 = vld [vmem:[#allocation2 + $0x172] sm:$0xff]
        %v1564 = vld [vmem:[#allocation2 + $0x182] sm:$0xff]
        %v1565 = vld [vmem:[#allocation2 + $0x18a] sm:$0xff]
        %v1566 = vld [vmem:[#allocation2 + $0x19a] sm:$0xff]
        %v1567 = vld [vmem:[#allocation2 + $0x1a2] sm:$0xff]
        %s1568 = scalar_lea.vmem [#allocation5], 128
        %v1569 = vld [vmem:[%s1568] sm:$0xff]
        %v1570 = vld [vmem:[%s1568 + $0x8] sm:$0xff]
        %v1571 = vld [vmem:[%s1568 + $0x10] sm:$0xff]
        %v1572 = vld [vmem:[%s1568 + $0x18] sm:$0xff]
        %v1573 = vld [vmem:[%s1568 + $0x20] sm:$0xff]
        %v1574 = vld [vmem:[%s1568 + $0x28] sm:$0xff]
        %v1575 = vld [vmem:[%s1568 + $0x30] sm:$0xff]
        %v1576 = vld [vmem:[%s1568 + $0x38] sm:$0xff]
        %v1578 = vsel %vm264, %v1532, 0
        %v1581 = vsel %vm264, %v1533, 0
        %v1584 = vsel %vm264, %v1534, 0
        %v1587 = vsel %vm264, %v1535, 0
        %v1590 = vsel %vm264, %v1536, 0
        %v1593 = vsel %vm264, %v1537, 0
        %v1596 = vsel %vm264, %v1538, 0
        %v1599 = vsel %vm264, %v1539, 0
        %v1602 = vsel %vm264, %v1540, 0
        %v1605 = vsel %vm264, %v1541, 0
        %v1608 = vsel %vm264, %v1542, 0
        %v1611 = vsel %vm264, %v1543, 0
        %v1614 = vsel %vm264, %v1544, 0
        %v1617 = vsel %vm264, %v1545, 0
        %v1620 = vsel %vm264, %v1546, 0
        %v1623 = vsel %vm264, %v1547, 0
        %v1626 = vsel %vm264, %v1548, 0
        %v1629 = vsel %vm264, %v1549, 0
        %v1632 = vsel %vm264, %v1550, 0
        %v1635 = vsel %vm264, %v1551, 0
        %v1638 = vsel %vm264, %v1552, 0
        %v1641 = vsel %vm264, %v1553, 0
        %v1644 = vsel %vm264, %v1554, 0
        %v1647 = vsel %vm264, %v1555, 0
        %v1650 = vsel %vm264, %v1556, 0
        %v1653 = vsel %vm264, %v1557, 0
        %v1656 = vsel %vm264, %v1558, 0
        %v1659 = vsel %vm264, %v1559, 0
        %v1662 = vsel %vm264, %v1560, 0
        %v1665 = vsel %vm264, %v1561, 0
        %v1668 = vsel %vm264, %v1562, 0
        %v1671 = vsel %vm264, %v1563, 0
        %1673 = vmatpush.msra.mxu0 0.0
        %1674 = vmatpush.msra.mxu0 0.0
        %1675 = vmatpush.msra.mxu0 0.0
        %1676 = vmatpush.msra.mxu0 0.0
        %1677 = vmatpush.msra.mxu0 0.0
        %1678 = vmatpush.msra.mxu0 0.0
        %1679 = vmatpush.msra.mxu0 0.0
        %1680 = vmatpush.msra.mxu0 0.0
        %1681 = vmatpush.msra.mxu0 %v1576
        %1682 = vmatpush.msra.mxu0 %v1575
        %1683 = vmatpush.msra.mxu0 %v1574
        %1684 = vmatpush.msra.mxu0 %v1573
        %1685 = vmatpush.msra.mxu0 %v1572
        %1686 = vmatpush.msra.mxu0 %v1571
        %1687 = vmatpush.msra.mxu0 %v1570
        %1688 = vmatpush.msra.mxu0 %v1569
        %1689 = vmatmul.f32.gmra.mxu0 %v1578
        %v1690 = vpop.f32.mrf.mxu0
        %v1691 = vadd.f32 0.0, %v1690
        %1692 = vmatmul.f32.gmra.mxu0 %v1581
        %v1693 = vpop.f32.mrf.mxu0
        %v1694 = vadd.f32 0.0, %v1693
        %1695 = vmatmul.f32.gmra.mxu0 %v1584
        %v1696 = vpop.f32.mrf.mxu0
        %v1697 = vadd.f32 0.0, %v1696
        %1698 = vmatmul.f32.gmra.mxu0 %v1587
        %v1699 = vpop.f32.mrf.mxu0
        %v1700 = vadd.f32 0.0, %v1699
        %1701 = vmatmul.f32.gmra.mxu0 %v1590
        %v1702 = vpop.f32.mrf.mxu0
        %v1703 = vadd.f32 0.0, %v1702
        %1704 = vmatmul.f32.gmra.mxu0 %v1593
        %v1705 = vpop.f32.mrf.mxu0
        %v1706 = vadd.f32 0.0, %v1705
        %1707 = vmatmul.f32.gmra.mxu0 %v1596
        %v1708 = vpop.f32.mrf.mxu0
        %v1709 = vadd.f32 0.0, %v1708
        %1710 = vmatmul.f32.gmra.mxu0 %v1599
        %v1711 = vpop.f32.mrf.mxu0
        %v1712 = vadd.f32 0.0, %v1711
        %1713 = vmatmul.f32.gmra.mxu0 %v1602
        %v1714 = vpop.f32.mrf.mxu0
        %v1715 = vadd.f32 0.0, %v1714
        %1716 = vmatmul.f32.gmra.mxu0 %v1605
        %v1717 = vpop.f32.mrf.mxu0
        %v1718 = vadd.f32 0.0, %v1717
        %1719 = vmatmul.f32.gmra.mxu0 %v1608
        %v1720 = vpop.f32.mrf.mxu0
        %v1721 = vadd.f32 0.0, %v1720
        %1722 = vmatmul.f32.gmra.mxu0 %v1611
        %v1723 = vpop.f32.mrf.mxu0
        %v1724 = vadd.f32 0.0, %v1723
        %1725 = vmatmul.f32.gmra.mxu0 %v1614
        %v1726 = vpop.f32.mrf.mxu0
        %v1727 = vadd.f32 0.0, %v1726
        %1728 = vmatmul.f32.gmra.mxu0 %v1617
        %v1729 = vpop.f32.mrf.mxu0
        %v1730 = vadd.f32 0.0, %v1729
        %1731 = vmatmul.f32.gmra.mxu0 %v1620
        %v1732 = vpop.f32.mrf.mxu0
        %v1733 = vadd.f32 0.0, %v1732
        %1734 = vmatmul.f32.gmra.mxu0 %v1623
        %v1735 = vpop.f32.mrf.mxu0
        %v1736 = vadd.f32 0.0, %v1735
        %1737 = vmatmul.f32.gmra.mxu0 %v1626
        %v1738 = vpop.f32.mrf.mxu0
        %v1739 = vadd.f32 0.0, %v1738
        %1740 = vmatmul.f32.gmra.mxu0 %v1629
        %v1741 = vpop.f32.mrf.mxu0
        %v1742 = vadd.f32 0.0, %v1741
        %1743 = vmatmul.f32.gmra.mxu0 %v1632
        %v1744 = vpop.f32.mrf.mxu0
        %v1745 = vadd.f32 0.0, %v1744
        %1746 = vmatmul.f32.gmra.mxu0 %v1635
        %v1747 = vpop.f32.mrf.mxu0
        %v1748 = vadd.f32 0.0, %v1747
        %1749 = vmatmul.f32.gmra.mxu0 %v1638
        %v1750 = vpop.f32.mrf.mxu0
        %v1751 = vadd.f32 0.0, %v1750
        %1752 = vmatmul.f32.gmra.mxu0 %v1641
        %v1753 = vpop.f32.mrf.mxu0
        %v1754 = vadd.f32 0.0, %v1753
        %1755 = vmatmul.f32.gmra.mxu0 %v1644
        %v1756 = vpop.f32.mrf.mxu0
        %v1757 = vadd.f32 0.0, %v1756
        %1758 = vmatmul.f32.gmra.mxu0 %v1647
        %v1759 = vpop.f32.mrf.mxu0
        %v1760 = vadd.f32 0.0, %v1759
        %1761 = vmatmul.f32.gmra.mxu0 %v1650
        %v1762 = vpop.f32.mrf.mxu0
        %v1763 = vadd.f32 0.0, %v1762
        %1764 = vmatmul.f32.gmra.mxu0 %v1653
        %v1765 = vpop.f32.mrf.mxu0
        %v1766 = vadd.f32 0.0, %v1765
        %1767 = vmatmul.f32.gmra.mxu0 %v1656
        %v1768 = vpop.f32.mrf.mxu0
        %v1769 = vadd.f32 0.0, %v1768
        %1770 = vmatmul.f32.gmra.mxu0 %v1659
        %v1771 = vpop.f32.mrf.mxu0
        %v1772 = vadd.f32 0.0, %v1771
        %1773 = vmatmul.f32.gmra.mxu0 %v1662
        %v1774 = vpop.f32.mrf.mxu0
        %v1775 = vadd.f32 0.0, %v1774
        %1776 = vmatmul.f32.gmra.mxu0 %v1665
        %v1777 = vpop.f32.mrf.mxu0
        %v1778 = vadd.f32 0.0, %v1777
        %1779 = vmatmul.f32.gmra.mxu0 %v1668
        %v1780 = vpop.f32.mrf.mxu0
        %v1781 = vadd.f32 0.0, %v1780
        %1782 = vmatmul.f32.gmra.mxu0 %v1671
        %v1783 = vpop.f32.mrf.mxu0
        %v1784 = vadd.f32 0.0, %v1783
        %1785 = vdwg.mxu0
        %v1786 = vadd.f32 %v1500, %v1691
        %v1787 = vadd.f32 %v1501, %v1694
        %v1788 = vadd.f32 %v1502, %v1697
        %v1789 = vadd.f32 %v1503, %v1700
        %v1790 = vadd.f32 %v1504, %v1703
        %v1791 = vadd.f32 %v1505, %v1706
        %v1792 = vadd.f32 %v1506, %v1709
        %v1793 = vadd.f32 %v1507, %v1712
        %v1794 = vadd.f32 %v1508, %v1715
        %v1795 = vadd.f32 %v1509, %v1718
        %v1796 = vadd.f32 %v1510, %v1721
        %v1797 = vadd.f32 %v1511, %v1724
        %v1798 = vadd.f32 %v1512, %v1727
        %v1799 = vadd.f32 %v1513, %v1730
        %v1800 = vadd.f32 %v1514, %v1733
        %v1801 = vadd.f32 %v1515, %v1736
        %v1802 = vadd.f32 %v1516, %v1739
        %v1803 = vadd.f32 %v1517, %v1742
        %v1804 = vadd.f32 %v1518, %v1745
        %v1805 = vadd.f32 %v1519, %v1748
        %v1806 = vadd.f32 %v1520, %v1751
        %v1807 = vadd.f32 %v1521, %v1754
        %v1808 = vadd.f32 %v1522, %v1757
        %v1809 = vadd.f32 %v1523, %v1760
        %v1810 = vadd.f32 %v1524, %v1763
        %v1811 = vadd.f32 %v1525, %v1766
        %v1812 = vadd.f32 %v1526, %v1769
        %v1813 = vadd.f32 %v1527, %v1772
        %v1814 = vadd.f32 %v1528, %v1775
        %v1815 = vadd.f32 %v1529, %v1778
        %v1816 = vadd.f32 %v1530, %v1781
        %v1817 = vadd.f32 %v1531, %v1784
        %s1818 = scalar_lea.vmem [#allocation5], 320
        %v1819 = vld [vmem:[%s1818] sm:$0xff]
        %v1820 = vld [vmem:[%s1818 + $0x8] sm:$0xff]
        %v1821 = vld [vmem:[%s1818 + $0x10] sm:$0xff]
        %v1822 = vld [vmem:[%s1818 + $0x18] sm:$0xff]
        %v1823 = vld [vmem:[%s1818 + $0x20] sm:$0xff]
        %v1824 = vld [vmem:[%s1818 + $0x28] sm:$0xff]
        %v1825 = vld [vmem:[%s1818 + $0x30] sm:$0xff]
        %v1826 = vld [vmem:[%s1818 + $0x38] sm:$0xff]
        %v1828 = vsel %vm264, %v1564, 0
        %v1831 = vsel %vm264, %v1565, 0
        %1833 = vmatpush.msra.mxu0 0.0
        %1834 = vmatpush.msra.mxu0 0.0
        %1835 = vmatpush.msra.mxu0 0.0
        %1836 = vmatpush.msra.mxu0 0.0
        %1837 = vmatpush.msra.mxu0 0.0
        %1838 = vmatpush.msra.mxu0 0.0
        %1839 = vmatpush.msra.mxu0 0.0
        %1840 = vmatpush.msra.mxu0 0.0
        %1841 = vmatpush.msra.mxu0 %v1826
        %1842 = vmatpush.msra.mxu0 %v1825
        %1843 = vmatpush.msra.mxu0 %v1824
        %1844 = vmatpush.msra.mxu0 %v1823
        %1845 = vmatpush.msra.mxu0 %v1822
        %1846 = vmatpush.msra.mxu0 %v1821
        %1847 = vmatpush.msra.mxu0 %v1820
        %1848 = vmatpush.msra.mxu0 %v1819
        %1849 = vmatmul.f32.gmra.mxu0 %v1584
        %v1850 = vpop.f32.mrf.mxu0
        %v1851 = vadd.f32 0.0, %v1850
        %1852 = vmatmul.f32.gmra.mxu0 %v1587
        %v1853 = vpop.f32.mrf.mxu0
        %v1854 = vadd.f32 0.0, %v1853
        %1855 = vmatmul.f32.gmra.mxu0 %v1590
        %v1856 = vpop.f32.mrf.mxu0
        %v1857 = vadd.f32 0.0, %v1856
        %1858 = vmatmul.f32.gmra.mxu0 %v1593
        %v1859 = vpop.f32.mrf.mxu0
        %v1860 = vadd.f32 0.0, %v1859
        %1861 = vmatmul.f32.gmra.mxu0 %v1596
        %v1862 = vpop.f32.mrf.mxu0
        %v1863 = vadd.f32 0.0, %v1862
        %1864 = vmatmul.f32.gmra.mxu0 %v1599
        %v1865 = vpop.f32.mrf.mxu0
        %v1866 = vadd.f32 0.0, %v1865
        %1867 = vmatmul.f32.gmra.mxu0 %v1602
        %v1868 = vpop.f32.mrf.mxu0
        %v1869 = vadd.f32 0.0, %v1868
        %1870 = vmatmul.f32.gmra.mxu0 %v1605
        %v1871 = vpop.f32.mrf.mxu0
        %v1872 = vadd.f32 0.0, %v1871
        %1873 = vmatmul.f32.gmra.mxu0 %v1608
        %v1874 = vpop.f32.mrf.mxu0
        %v1875 = vadd.f32 0.0, %v1874
        %1876 = vmatmul.f32.gmra.mxu0 %v1611
        %v1877 = vpop.f32.mrf.mxu0
        %v1878 = vadd.f32 0.0, %v1877
        %1879 = vmatmul.f32.gmra.mxu0 %v1614
        %v1880 = vpop.f32.mrf.mxu0
        %v1881 = vadd.f32 0.0, %v1880
        %1882 = vmatmul.f32.gmra.mxu0 %v1617
        %v1883 = vpop.f32.mrf.mxu0
        %v1884 = vadd.f32 0.0, %v1883
        %1885 = vmatmul.f32.gmra.mxu0 %v1620
        %v1886 = vpop.f32.mrf.mxu0
        %v1887 = vadd.f32 0.0, %v1886
        %1888 = vmatmul.f32.gmra.mxu0 %v1623
        %v1889 = vpop.f32.mrf.mxu0
        %v1890 = vadd.f32 0.0, %v1889
        %1891 = vmatmul.f32.gmra.mxu0 %v1626
        %v1892 = vpop.f32.mrf.mxu0
        %v1893 = vadd.f32 0.0, %v1892
        %1894 = vmatmul.f32.gmra.mxu0 %v1629
        %v1895 = vpop.f32.mrf.mxu0
        %v1896 = vadd.f32 0.0, %v1895
        %1897 = vmatmul.f32.gmra.mxu0 %v1632
        %v1898 = vpop.f32.mrf.mxu0
        %v1899 = vadd.f32 0.0, %v1898
        %1900 = vmatmul.f32.gmra.mxu0 %v1635
        %v1901 = vpop.f32.mrf.mxu0
        %v1902 = vadd.f32 0.0, %v1901
        %1903 = vmatmul.f32.gmra.mxu0 %v1638
        %v1904 = vpop.f32.mrf.mxu0
        %v1905 = vadd.f32 0.0, %v1904
        %1906 = vmatmul.f32.gmra.mxu0 %v1641
        %v1907 = vpop.f32.mrf.mxu0
        %v1908 = vadd.f32 0.0, %v1907
        %1909 = vmatmul.f32.gmra.mxu0 %v1644
        %v1910 = vpop.f32.mrf.mxu0
        %v1911 = vadd.f32 0.0, %v1910
        %1912 = vmatmul.f32.gmra.mxu0 %v1647
        %v1913 = vpop.f32.mrf.mxu0
        %v1914 = vadd.f32 0.0, %v1913
        %1915 = vmatmul.f32.gmra.mxu0 %v1650
        %v1916 = vpop.f32.mrf.mxu0
        %v1917 = vadd.f32 0.0, %v1916
        %1918 = vmatmul.f32.gmra.mxu0 %v1653
        %v1919 = vpop.f32.mrf.mxu0
        %v1920 = vadd.f32 0.0, %v1919
        %1921 = vmatmul.f32.gmra.mxu0 %v1656
        %v1922 = vpop.f32.mrf.mxu0
        %v1923 = vadd.f32 0.0, %v1922
        %1924 = vmatmul.f32.gmra.mxu0 %v1659
        %v1925 = vpop.f32.mrf.mxu0
        %v1926 = vadd.f32 0.0, %v1925
        %1927 = vmatmul.f32.gmra.mxu0 %v1662
        %v1928 = vpop.f32.mrf.mxu0
        %v1929 = vadd.f32 0.0, %v1928
        %1930 = vmatmul.f32.gmra.mxu0 %v1665
        %v1931 = vpop.f32.mrf.mxu0
        %v1932 = vadd.f32 0.0, %v1931
        %1933 = vmatmul.f32.gmra.mxu0 %v1668
        %v1934 = vpop.f32.mrf.mxu0
        %v1935 = vadd.f32 0.0, %v1934
        %1936 = vmatmul.f32.gmra.mxu0 %v1671
        %v1937 = vpop.f32.mrf.mxu0
        %v1938 = vadd.f32 0.0, %v1937
        %1939 = vmatmul.f32.gmra.mxu0 %v1828
        %v1940 = vpop.f32.mrf.mxu0
        %v1941 = vadd.f32 0.0, %v1940
        %1942 = vmatmul.f32.gmra.mxu0 %v1831
        %v1943 = vpop.f32.mrf.mxu0
        %v1944 = vadd.f32 0.0, %v1943
        %1945 = vdwg.mxu0
        %v1946 = vadd.f32 %v1786, %v1851
        %v1947 = vadd.f32 %v1787, %v1854
        %v1948 = vadd.f32 %v1788, %v1857
        %v1949 = vadd.f32 %v1789, %v1860
        %v1950 = vadd.f32 %v1790, %v1863
        %v1951 = vadd.f32 %v1791, %v1866
        %v1952 = vadd.f32 %v1792, %v1869
        %v1953 = vadd.f32 %v1793, %v1872
        %v1954 = vadd.f32 %v1794, %v1875
        %v1955 = vadd.f32 %v1795, %v1878
        %v1956 = vadd.f32 %v1796, %v1881
        %v1957 = vadd.f32 %v1797, %v1884
        %v1958 = vadd.f32 %v1798, %v1887
        %v1959 = vadd.f32 %v1799, %v1890
        %v1960 = vadd.f32 %v1800, %v1893
        %v1961 = vadd.f32 %v1801, %v1896
        %v1962 = vadd.f32 %v1802, %v1899
        %v1963 = vadd.f32 %v1803, %v1902
        %v1964 = vadd.f32 %v1804, %v1905
        %v1965 = vadd.f32 %v1805, %v1908
        %v1966 = vadd.f32 %v1806, %v1911
        %v1967 = vadd.f32 %v1807, %v1914
        %v1968 = vadd.f32 %v1808, %v1917
        %v1969 = vadd.f32 %v1809, %v1920
        %v1970 = vadd.f32 %v1810, %v1923
        %v1971 = vadd.f32 %v1811, %v1926
        %v1972 = vadd.f32 %v1812, %v1929
        %v1973 = vadd.f32 %v1813, %v1932
        %v1974 = vadd.f32 %v1814, %v1935
        %v1975 = vadd.f32 %v1815, %v1938
        %v1976 = vadd.f32 %v1816, %v1941
        %v1977 = vadd.f32 %v1817, %v1944
        %s1978 = scalar_lea.vmem [#allocation5], 512
        %v1979 = vld [vmem:[%s1978] sm:$0xff]
        %v1980 = vld [vmem:[%s1978 + $0x8] sm:$0xff]
        %v1981 = vld [vmem:[%s1978 + $0x10] sm:$0xff]
        %v1982 = vld [vmem:[%s1978 + $0x18] sm:$0xff]
        %v1983 = vld [vmem:[%s1978 + $0x20] sm:$0xff]
        %v1984 = vld [vmem:[%s1978 + $0x28] sm:$0xff]
        %v1985 = vld [vmem:[%s1978 + $0x30] sm:$0xff]
        %v1986 = vld [vmem:[%s1978 + $0x38] sm:$0xff]
        %v1988 = vsel %vm264, %v1566, 0
        %v1991 = vsel %vm264, %v1567, 0
        %1993 = vmatpush.msra.mxu0 0.0
        %1994 = vmatpush.msra.mxu0 0.0
        %1995 = vmatpush.msra.mxu0 0.0
        %1996 = vmatpush.msra.mxu0 0.0
        %1997 = vmatpush.msra.mxu0 0.0
        %1998 = vmatpush.msra.mxu0 0.0
        %1999 = vmatpush.msra.mxu0 0.0
        %2000 = vmatpush.msra.mxu0 0.0
        %2001 = vmatpush.msra.mxu0 %v1986
        %2002 = vmatpush.msra.mxu0 %v1985
        %2003 = vmatpush.msra.mxu0 %v1984
        %2004 = vmatpush.msra.mxu0 %v1983
        %2005 = vmatpush.msra.mxu0 %v1982
        %2006 = vmatpush.msra.mxu0 %v1981
        %2007 = vmatpush.msra.mxu0 %v1980
        %2008 = vmatpush.msra.mxu0 %v1979
        %2009 = vmatmul.f32.gmra.mxu0 %v1590
        %v2010 = vpop.f32.mrf.mxu0
        %v2011 = vadd.f32 0.0, %v2010
        %2012 = vmatmul.f32.gmra.mxu0 %v1593
        %v2013 = vpop.f32.mrf.mxu0
        %v2014 = vadd.f32 0.0, %v2013
        %2015 = vmatmul.f32.gmra.mxu0 %v1596
        %v2016 = vpop.f32.mrf.mxu0
        %v2017 = vadd.f32 0.0, %v2016
        %2018 = vmatmul.f32.gmra.mxu0 %v1599
        %v2019 = vpop.f32.mrf.mxu0
        %v2020 = vadd.f32 0.0, %v2019
        %2021 = vmatmul.f32.gmra.mxu0 %v1602
        %v2022 = vpop.f32.mrf.mxu0
        %v2023 = vadd.f32 0.0, %v2022
        %2024 = vmatmul.f32.gmra.mxu0 %v1605
        %v2025 = vpop.f32.mrf.mxu0
        %v2026 = vadd.f32 0.0, %v2025
        %2027 = vmatmul.f32.gmra.mxu0 %v1608
        %v2028 = vpop.f32.mrf.mxu0
        %v2029 = vadd.f32 0.0, %v2028
        %2030 = vmatmul.f32.gmra.mxu0 %v1611
        %v2031 = vpop.f32.mrf.mxu0
        %v2032 = vadd.f32 0.0, %v2031
        %2033 = vmatmul.f32.gmra.mxu0 %v1614
        %v2034 = vpop.f32.mrf.mxu0
        %v2035 = vadd.f32 0.0, %v2034
        %2036 = vmatmul.f32.gmra.mxu0 %v1617
        %v2037 = vpop.f32.mrf.mxu0
        %v2038 = vadd.f32 0.0, %v2037
        %2039 = vmatmul.f32.gmra.mxu0 %v1620
        %v2040 = vpop.f32.mrf.mxu0
        %v2041 = vadd.f32 0.0, %v2040
        %2042 = vmatmul.f32.gmra.mxu0 %v1623
        %v2043 = vpop.f32.mrf.mxu0
        %v2044 = vadd.f32 0.0, %v2043
        %2045 = vmatmul.f32.gmra.mxu0 %v1626
        %v2046 = vpop.f32.mrf.mxu0
        %v2047 = vadd.f32 0.0, %v2046
        %2048 = vmatmul.f32.gmra.mxu0 %v1629
        %v2049 = vpop.f32.mrf.mxu0
        %v2050 = vadd.f32 0.0, %v2049
        %2051 = vmatmul.f32.gmra.mxu0 %v1632
        %v2052 = vpop.f32.mrf.mxu0
        %v2053 = vadd.f32 0.0, %v2052
        %2054 = vmatmul.f32.gmra.mxu0 %v1635
        %v2055 = vpop.f32.mrf.mxu0
        %v2056 = vadd.f32 0.0, %v2055
        %2057 = vmatmul.f32.gmra.mxu0 %v1638
        %v2058 = vpop.f32.mrf.mxu0
        %v2059 = vadd.f32 0.0, %v2058
        %2060 = vmatmul.f32.gmra.mxu0 %v1641
        %v2061 = vpop.f32.mrf.mxu0
        %v2062 = vadd.f32 0.0, %v2061
        %2063 = vmatmul.f32.gmra.mxu0 %v1644
        %v2064 = vpop.f32.mrf.mxu0
        %v2065 = vadd.f32 0.0, %v2064
        %2066 = vmatmul.f32.gmra.mxu0 %v1647
        %v2067 = vpop.f32.mrf.mxu0
        %v2068 = vadd.f32 0.0, %v2067
        %2069 = vmatmul.f32.gmra.mxu0 %v1650
        %v2070 = vpop.f32.mrf.mxu0
        %v2071 = vadd.f32 0.0, %v2070
        %2072 = vmatmul.f32.gmra.mxu0 %v1653
        %v2073 = vpop.f32.mrf.mxu0
        %v2074 = vadd.f32 0.0, %v2073
        %2075 = vmatmul.f32.gmra.mxu0 %v1656
        %v2076 = vpop.f32.mrf.mxu0
        %v2077 = vadd.f32 0.0, %v2076
        %2078 = vmatmul.f32.gmra.mxu0 %v1659
        %v2079 = vpop.f32.mrf.mxu0
        %v2080 = vadd.f32 0.0, %v2079
        %2081 = vmatmul.f32.gmra.mxu0 %v1662
        %v2082 = vpop.f32.mrf.mxu0
        %v2083 = vadd.f32 0.0, %v2082
        %2084 = vmatmul.f32.gmra.mxu0 %v1665
        %v2085 = vpop.f32.mrf.mxu0
        %v2086 = vadd.f32 0.0, %v2085
        %2087 = vmatmul.f32.gmra.mxu0 %v1668
        %v2088 = vpop.f32.mrf.mxu0
        %v2089 = vadd.f32 0.0, %v2088
        %2090 = vmatmul.f32.gmra.mxu0 %v1671
        %v2091 = vpop.f32.mrf.mxu0
        %v2092 = vadd.f32 0.0, %v2091
        %2093 = vmatmul.f32.gmra.mxu0 %v1828
        %v2094 = vpop.f32.mrf.mxu0
        %v2095 = vadd.f32 0.0, %v2094
        %2096 = vmatmul.f32.gmra.mxu0 %v1831
        %v2097 = vpop.f32.mrf.mxu0
        %v2098 = vadd.f32 0.0, %v2097
        %2099 = vmatmul.f32.gmra.mxu0 %v1988
        %v2100 = vpop.f32.mrf.mxu0
        %v2101 = vadd.f32 0.0, %v2100
        %2102 = vmatmul.f32.gmra.mxu0 %v1991
        %v2103 = vpop.f32.mrf.mxu0
        %v2104 = vadd.f32 0.0, %v2103
        %2105 = vdwg.mxu0
        %v2106 = vadd.f32 %v1946, %v2011
        %v2107 = vadd.f32 %v1947, %v2014
        %v2108 = vadd.f32 %v1948, %v2017
        %v2109 = vadd.f32 %v1949, %v2020
        %v2110 = vadd.f32 %v1950, %v2023
        %v2111 = vadd.f32 %v1951, %v2026
        %v2112 = vadd.f32 %v1952, %v2029
        %v2113 = vadd.f32 %v1953, %v2032
        %v2114 = vadd.f32 %v1954, %v2035
        %v2115 = vadd.f32 %v1955, %v2038
        %v2116 = vadd.f32 %v1956, %v2041
        %v2117 = vadd.f32 %v1957, %v2044
        %v2118 = vadd.f32 %v1958, %v2047
        %v2119 = vadd.f32 %v1959, %v2050
        %v2120 = vadd.f32 %v1960, %v2053
        %v2121 = vadd.f32 %v1961, %v2056
        %v2122 = vadd.f32 %v1962, %v2059
        %v2123 = vadd.f32 %v1963, %v2062
        %v2124 = vadd.f32 %v1964, %v2065
        %v2125 = vadd.f32 %v1965, %v2068
        %v2126 = vadd.f32 %v1966, %v2071
        %v2127 = vadd.f32 %v1967, %v2074
        %v2128 = vadd.f32 %v1968, %v2077
        %v2129 = vadd.f32 %v1969, %v2080
        %v2130 = vadd.f32 %v1970, %v2083
        %v2131 = vadd.f32 %v1971, %v2086
        %v2132 = vadd.f32 %v1972, %v2089
        %v2133 = vadd.f32 %v1973, %v2092
        %v2134 = vadd.f32 %v1974, %v2095
        %v2135 = vadd.f32 %v1975, %v2098
        %v2136 = vadd.f32 %v1976, %v2101
        %v2137 = vadd.f32 %v1977, %v2104
        %v2138 = vld [vmem:[%s2] sm:$0x1]
        %v2140 = vperm.slane %v2138, 0
        %v2142 = vadd.f32 %v2106, %v2140
        %v2143 = vadd.f32 %v2107, %v2140
        %v2144 = vadd.f32 %v2108, %v2140
        %v2145 = vadd.f32 %v2109, %v2140
        %v2146 = vadd.f32 %v2110, %v2140
        %v2147 = vadd.f32 %v2111, %v2140
        %v2148 = vadd.f32 %v2112, %v2140
        %v2149 = vadd.f32 %v2113, %v2140
        %v2150 = vadd.f32 %v2114, %v2140
        %v2151 = vadd.f32 %v2115, %v2140
        %v2152 = vadd.f32 %v2116, %v2140
        %v2153 = vadd.f32 %v2117, %v2140
        %v2154 = vadd.f32 %v2118, %v2140
        %v2155 = vadd.f32 %v2119, %v2140
        %v2156 = vadd.f32 %v2120, %v2140
        %v2157 = vadd.f32 %v2121, %v2140
        %v2158 = vadd.f32 %v2122, %v2140
        %v2159 = vadd.f32 %v2123, %v2140
        %v2160 = vadd.f32 %v2124, %v2140
        %v2161 = vadd.f32 %v2125, %v2140
        %v2162 = vadd.f32 %v2126, %v2140
        %v2163 = vadd.f32 %v2127, %v2140
        %v2164 = vadd.f32 %v2128, %v2140
        %v2165 = vadd.f32 %v2129, %v2140
        %v2166 = vadd.f32 %v2130, %v2140
        %v2167 = vadd.f32 %v2131, %v2140
        %v2168 = vadd.f32 %v2132, %v2140
        %v2169 = vadd.f32 %v2133, %v2140
        %v2170 = vadd.f32 %v2134, %v2140
        %v2171 = vadd.f32 %v2135, %v2140
        %v2172 = vadd.f32 %v2136, %v2140
        %v2173 = vadd.f32 %v2137, %v2140
        %v2174 = vmax.f32 %v2142, 0.0
        %v2175 = vmax.f32 %v2143, 0.0
        %v2176 = vmax.f32 %v2144, 0.0
        %v2177 = vmax.f32 %v2145, 0.0
        %v2178 = vmax.f32 %v2146, 0.0
        %v2179 = vmax.f32 %v2147, 0.0
        %v2180 = vmax.f32 %v2148, 0.0
        %v2181 = vmax.f32 %v2149, 0.0
        %v2182 = vmax.f32 %v2150, 0.0
        %v2183 = vmax.f32 %v2151, 0.0
        %v2184 = vmax.f32 %v2152, 0.0
        %v2185 = vmax.f32 %v2153, 0.0
        %v2186 = vmax.f32 %v2154, 0.0
        %v2187 = vmax.f32 %v2155, 0.0
        %v2188 = vmax.f32 %v2156, 0.0
        %v2189 = vmax.f32 %v2157, 0.0
        %v2190 = vmax.f32 %v2158, 0.0
        %v2191 = vmax.f32 %v2159, 0.0
        %v2192 = vmax.f32 %v2160, 0.0
        %v2193 = vmax.f32 %v2161, 0.0
        %v2194 = vmax.f32 %v2162, 0.0
        %v2195 = vmax.f32 %v2163, 0.0
        %v2196 = vmax.f32 %v2164, 0.0
        %v2197 = vmax.f32 %v2165, 0.0
        %v2198 = vmax.f32 %v2166, 0.0
        %v2199 = vmax.f32 %v2167, 0.0
        %v2200 = vmax.f32 %v2168, 0.0
        %v2201 = vmax.f32 %v2169, 0.0
        %v2202 = vmax.f32 %v2170, 0.0
        %v2203 = vmax.f32 %v2171, 0.0
        %v2204 = vmax.f32 %v2172, 0.0
        %v2205 = vmax.f32 %v2173, 0.0
        %v2206 = vld [vmem:[%s3] sm:$0xff]
        %v2207 = vld [vmem:[%s3 + $0x8] sm:$0xff]
        %v2208 = vld [vmem:[%s4] sm:$0xff]
        %v2209 = vld [vmem:[%s4 + $0x8] sm:$0xff]
        %2211 = vset.pattern.permute.xlu0 0
        %2212 = vperm.xlu0 %2211, %v2208
        %v2213 = vpop.permute.xlu0 %2212
        %2216 = vset.pattern.permute.xlu0 0
        %2217 = vperm.xlu0 %2216, %v2209
        %v2218 = vpop.permute.xlu0 %2217
        %2220 = vmatpush.xpose.msra.mxu0 %v2189
        %2221 = vmatpush.xpose.msra.mxu0 %v2188
        %2222 = vmatpush.xpose.msra.mxu0 %v2187
        %2223 = vmatpush.xpose.msra.mxu0 %v2186
        %2224 = vmatpush.xpose.msra.mxu0 %v2185
        %2225 = vmatpush.xpose.msra.mxu0 %v2184
        %2226 = vmatpush.xpose.msra.mxu0 %v2183
        %2227 = vmatpush.xpose.msra.mxu0 %v2182
        %2228 = vmatpush.xpose.msra.mxu0 %v2181
        %2229 = vmatpush.xpose.msra.mxu0 %v2180
        %2230 = vmatpush.xpose.msra.mxu0 %v2179
        %2231 = vmatpush.xpose.msra.mxu0 %v2178
        %2232 = vmatpush.xpose.msra.mxu0 %v2177
        %2233 = vmatpush.xpose.msra.mxu0 %v2176
        %2234 = vmatpush.xpose.msra.mxu0 %v2175
        %2235 = vmatpush.xpose.msra.mxu0 %v2174
        %2236 = vmatmul.f32.gmra.mxu0 %v2206
        %v2237 = vpop.f32.mrf.mxu0
        %v2238 = vadd.f32 %v2213, %v2237
        %2239 = vmatmul.f32.gmra.mxu0 %v2207
        %v2240 = vpop.f32.mrf.mxu0
        %v2241 = vadd.f32 %v2218, %v2240
        %2242 = vdwg.mxu0
        %2243 = vmatpush.xpose.msra.mxu0 %v2205
        %2244 = vmatpush.xpose.msra.mxu0 %v2204
        %2245 = vmatpush.xpose.msra.mxu0 %v2203
        %2246 = vmatpush.xpose.msra.mxu0 %v2202
        %2247 = vmatpush.xpose.msra.mxu0 %v2201
        %2248 = vmatpush.xpose.msra.mxu0 %v2200
        %2249 = vmatpush.xpose.msra.mxu0 %v2199
        %2250 = vmatpush.xpose.msra.mxu0 %v2198
        %2251 = vmatpush.xpose.msra.mxu0 %v2197
        %2252 = vmatpush.xpose.msra.mxu0 %v2196
        %2253 = vmatpush.xpose.msra.mxu0 %v2195
        %2254 = vmatpush.xpose.msra.mxu0 %v2194
        %2255 = vmatpush.xpose.msra.mxu0 %v2193
        %2256 = vmatpush.xpose.msra.mxu0 %v2192
        %2257 = vmatpush.xpose.msra.mxu0 %v2191
        %2258 = vmatpush.xpose.msra.mxu0 %v2190
        %2259 = vmatmul.f32.gmra.mxu0 %v2206
        %v2260 = vpop.f32.mrf.mxu0
        %v2261 = vadd.f32 %v2213, %v2260
        %2262 = vmatmul.f32.gmra.mxu0 %v2207
        %v2263 = vpop.f32.mrf.mxu0
        %v2264 = vadd.f32 %v2218, %v2263
        %2265 = vdwg.mxu0
        %v2266 = vmax.f32 %v2238, 0.0
        %v2267 = vmax.f32 %v2261, 0.0
        %v2268 = vmax.f32 %v2241, 0.0
        %v2269 = vmax.f32 %v2264, 0.0
        %2270 = vst [vmem:[%s263] sm:$0xff] %v2266
        %2271 = vst [vmem:[%s263 + $0x8] sm:$0xff] %v2267
        %2272 = vst [vmem:[%s263 + $0x10] sm:$0xff] %v2268
        %2273 = vst [vmem:[%s263 + $0x18] sm:$0xff] %v2269
        %p2274 = scmp.lt.s32.totalorder %s20, 1
        %s2275 = scalar_select %p2274, %s20, 1
        %s2276 = smul.addr %s2275, 4
        %s2277 = smul.addr %s2276, 8
        %s2278 = scalar_lea.vmem %s5, %s2277
        // Predicated region
        $region49: #{bc_head_forward.1} parent=39 // pred_check
          %p2279 = pneg %p148
        $region50: #{bc_head_forward.1} parent=39 // pred_check_branch
          %2281 = sbr.rel (%p2279) target = $region52
        $region51: #{bc_head_forward.1} parent=39 // pred_region
          _
        $region52: #{bc_head_forward.1} parent=39 // pred_fallthru
          _
      $region40: #{bc_head_forward.1} parent=5 // pred_fallthru
        _
      %p2282 = scmp.le.s32.totalorder 2, %s15
      // Predicated region
      $region53: #{bc_head_forward.1} parent=5 // pred_check
        %p2283 = pneg %p2282
      $region54: #{bc_head_forward.1} parent=5 // pred_check_branch
        %2285 = sbr.rel (%p2283) target = $region56
      $region55: #{bc_head_forward.1} parent=5 // pred_region
        %s2286 = ssub.s32 %s15, 2
        // Predicated region
        $region57: #{bc_head_forward.1} parent=55 // pred_check
          %p2287 = pneg %p154
        $region58: #{bc_head_forward.1} parent=55 // pred_check_branch
          %2289 = sbr.rel (%p2287) target = $region60
        $region59: #{bc_head_forward.1} parent=55 // pred_region
          %p2290 = scmp.lt.s32.totalorder %s21, 1
          %s2291 = scalar_select %p2290, %s21, 1
          %s2292 = smul.addr %s2291, 4
          %s2293 = smul.addr %s2292, 8
          %s2294 = scalar_lea.vmem %s5, %s2293
        $region60: #{bc_head_forward.1} parent=55 // pred_fallthru
          _
      $region56: #{bc_head_forward.1} parent=5 // pred_fallthru
        _
    $region6: #{bc_head_forward.1} parent=1 // loop_footer
      %s19 = sadd.s32 1, %s15
    $region7: #{bc_head_forward.1} parent=1 // loop_footer_branch
      %14 = sbr.rel target = $region3
    $region8: #{bc_head_forward.1} parent=1 // loop_exit
      _
    %2295 = vsyncpa [#allocation4], 1
    %s2296 = scalar_lea.sflag [#allocation4], 1
    %2297 = vsyncpa %s2296, 1
    %2298 = vsyncpa [#allocation6], 1

</llo_original>
